<compile_context>
chip_gen: v6e
topology: v6e:2x2x1
jax: 0.10.0
libtpu: 0.0.40
codegen_flags: <defaults>
</compile_context>

<pallas_src>
import functools
import math

import jax
import jax.numpy as jnp
from jax import lax
from jax.experimental import pallas as pl
from jax.experimental.pallas import tpu as pltpu

LN_EPS = 1e-5  # nn.LayerNorm default


def _layernorm(x, g, b):
    # x: (N, E) f32; g/b: (1, E) f32 -- kept in f32 (v5e has no bf16 VPU/EUP)
    mu = jnp.mean(x, axis=-1, keepdims=True)
    var = jnp.mean(jnp.square(x - mu), axis=-1, keepdims=True)
    return (x - mu) * lax.rsqrt(var + LN_EPS) * g + b


def cross_attn_block_kernel(x_ref, img_ref,
                            ln1_g_ref, ln1_b_ref, ln2_g_ref, ln2_b_ref,
                            wq_ref, wkv_ref, wo_ref, wfc_ref, wproj_ref,
                            out_ref, *, B, T, S, n_head, head_size, matmul_dtype):
    E = x_ref.shape[-1]
    A = n_head * head_size
    hs = head_size
    dt = matmul_dtype

    # Merge batch into matmul rows (leading-dim-only reshape, no relayout).
    x = x_ref[...].astype(jnp.float32).reshape(B * T, E)      # (B*T, E)
    img = img_ref[...].astype(jnp.float32).reshape(B * S, E)  # (B*S, E)

    # ---- x + att(ln1(x), image_features) ----
    xn = _layernorm(x, ln1_g_ref[...], ln1_b_ref[...])
    # single Q GEMM (attention scale already folded into W_q in the wrapper)
    # and single fused K/V GEMM over the image features
    q = jnp.dot(xn.astype(dt), wq_ref[...],
                preferred_element_type=jnp.float32)           # (B*T, A)
    kv = jnp.dot(img.astype(dt), wkv_ref[...],
                 preferred_element_type=jnp.float32)          # (B*S, 2A)
    k = kv[:, :A]
    v = kv[:, A:]

    # Head-batched attention: stack static (batch, head) slices into a leading
    # batch axis, then ONE 3-D matmul pair + ONE softmax for all heads/batches.
    qh = jnp.stack([q[b * T:(b + 1) * T, h * hs:(h + 1) * hs]
                    for b in range(B) for h in range(n_head)], axis=0)  # (B*H, T, hs)
    kh = jnp.stack([k[b * S:(b + 1) * S, h * hs:(h + 1) * hs]
                    for b in range(B) for h in range(n_head)], axis=0)  # (B*H, S, hs)
    vh = jnp.stack([v[b * S:(b + 1) * S, h * hs:(h + 1) * hs]
                    for b in range(B) for h in range(n_head)], axis=0)  # (B*H, S, hs)

    scores = jnp.einsum("bqd,bkd->bqk", qh.astype(dt), kh.astype(dt),
                        preferred_element_type=jnp.float32)   # (B*H, T, S)
    m = jnp.max(scores, axis=-1, keepdims=True)
    p = jnp.exp(scores - m)
    denom = jnp.sum(p, axis=-1, keepdims=True)
    p = p * pl.reciprocal(denom, approx=True)                 # EUP, not VALU
    ctx = jnp.einsum("bqk,bkd->bqd", p.astype(dt), vh.astype(dt),
                     preferred_element_type=jnp.float32)      # (B*H, T, hs)

    # Re-pack heads back to (B*T, A) and do a SINGLE output projection.
    ctx_all = jnp.concatenate(
        [jnp.concatenate([ctx[b * n_head + h] for h in range(n_head)], axis=-1)
         for b in range(B)], axis=0)                          # (B*T, A)
    x = x + jnp.dot(ctx_all.astype(dt), wo_ref[...],
                    preferred_element_type=jnp.float32)       # (B*T, E)

    # ---- x + ffn(ln2(x)) ----
    xn2 = _layernorm(x, ln2_g_ref[...], ln2_b_ref[...])
    hmid = jnp.maximum(jnp.dot(xn2.astype(dt), wfc_ref[...],
                               preferred_element_type=jnp.float32), 0.0)  # ReLU
    x = x + jnp.dot(hmid.astype(dt), wproj_ref[...],
                    preferred_element_type=jnp.float32)

    # At toy E=32 this store uses 32/128 lanes; at production E (multiple of
    # 128) the store is already lane-dense, so no extra flatten is done here.
    out_ref[...] = x.reshape(B, T, E).astype(out_ref.dtype)


def cross_attention_block(x, image_features, params, *, n_head, head_size,
                          matmul_dtype=jnp.float32):
    B, T, E = x.shape
    _, S, _ = image_features.shape
    A = n_head * head_size
    Fd = params["wfc"].shape[0]
    dt = matmul_dtype
    scale = 1.0 / math.sqrt(head_size)

    # One-time weight prep in XLA (outside the kernel hot path):
    #   transpose to (in, out), fuse K/V into one weight, fold the attention
    #   scale into W_q, optionally cast to the MXU input dtype (bf16 on v6e/v7x).
    wq_t = (params["wq"].T * scale).astype(dt)                                   # (E, A)
    wkv_t = jnp.concatenate([params["wk"], params["wv"]], axis=0).T.astype(dt)   # (E, 2A)
    wo_t = params["wo"].T.astype(dt)                                             # (A, E)
    wfc_t = params["wfc"].T.astype(dt)                                           # (E, Fd)
    wproj_t = params["wproj"].T.astype(dt)                                       # (Fd, E)

    kernel = functools.partial(cross_attn_block_kernel, B=B, T=T, S=S,
                               n_head=n_head, head_size=head_size,
                               matmul_dtype=dt)

    # Whole problem in one grid step: everything fits VMEM at these dims.
    # TODO(synk): at production dims (E~2-4K, Fd=3.5E, S~577) add T / Fd grid
    # tiling with streamed weight blocks (accumulator + pl.when, single-buffered
    # weights) so the kernel fits v7x's 64 MiB VMEM; set vmem_limit_bytes there.
    in_specs = [
        pl.BlockSpec((B, T, E), lambda i: (0, 0, 0)),   # x
        pl.BlockSpec((B, S, E), lambda i: (0, 0, 0)),   # image_features
        pl.BlockSpec((1, E), lambda i: (0, 0)),          # ln1 gamma
        pl.BlockSpec((1, E), lambda i: (0, 0)),          # ln1 beta
        pl.BlockSpec((1, E), lambda i: (0, 0)),          # ln2 gamma
        pl.BlockSpec((1, E), lambda i: (0, 0)),          # ln2 beta
        pl.BlockSpec((E, A), lambda i: (0, 0)),          # W_q^T (scale folded in)
        pl.BlockSpec((E, 2 * A), lambda i: (0, 0)),      # [W_k; W_v]^T fused
        pl.BlockSpec((A, E), lambda i: (0, 0)),          # W_o^T
        pl.BlockSpec((E, Fd), lambda i: (0, 0)),         # W_fc^T
        pl.BlockSpec((Fd, E), lambda i: (0, 0)),         # W_proj^T
    ]
    out_spec = pl.BlockSpec((B, T, E), lambda i: (0, 0, 0))

    return pl.pallas_call(
        kernel,
        out_shape=jax.ShapeDtypeStruct((B, T, E), x.dtype),
        grid_spec=pltpu.PrefetchScalarGridSpec(
            num_scalar_prefetch=0,
            grid=(1,),
            in_specs=in_specs,
            out_specs=out_spec,
        ),
        compiler_params=pltpu.CompilerParams(
            dimension_semantics=("arbitrary",)),
    )(x, image_features,
      params["ln1_g"], params["ln1_b"], params["ln2_g"], params["ln2_b"],
      wq_t, wkv_t, wo_t, wfc_t, wproj_t)


def reference_forward(x, img, p, *, n_head, head_size):
    """Plain-JAX reference matching the PyTorch module's forward."""
    def ln(v, g, b):
        mu = jnp.mean(v, axis=-1, keepdims=True)
        var = jnp.mean((v - mu) ** 2, axis=-1, keepdims=True)
        return (v - mu) / jnp.sqrt(var + LN_EPS) * g + b

    B, T, E = x.shape
    xn = ln(x, p["ln1_g"][0], p["ln1_b"][0])
    q = xn @ p["wq"].T
    k = img @ p["wk"].T
    v = img @ p["wv"].T
    q = q.reshape(B, T, n_head, head_size).transpose(0, 2, 1, 3)
    k = k.reshape(B, -1, n_head, head_size).transpose(0, 2, 1, 3)
    v = v.reshape(B, -1, n_head, head_size).transpose(0, 2, 1, 3)
    scores = jnp.einsum("bhtd,bhsd->bhts", q, k) / math.sqrt(head_size)
    a = jax.nn.softmax(scores, axis=-1)
    o = jnp.einsum("bhts,bhsd->bhtd", a, v)
    o = o.transpose(0, 2, 1, 3).reshape(B, T, -1)
    x = x + o @ p["wo"].T
    xn2 = ln(x, p["ln2_g"][0], p["ln2_b"][0])
    h = jax.nn.relu(xn2 @ p["wfc"].T)
    return x + h @ p["wproj"].T


if __name__ == "__main__":
    # Small config consistent with the module:
    # n_embd=32, dim_att=32, head_size_a=16 -> n_head=2, dim_ffn=64
    B, T, S = 2, 8, 16
    n_embd, dim_att, head_size, dim_ffn = 32, 32, 16, 64
    n_head = dim_att // head_size

    key = jax.random.PRNGKey(0)
    ks = jax.random.split(key, 12)

    params = {
        "ln1_g": 1.0 + 0.1 * jax.random.normal(ks[0], (1, n_embd), jnp.float32),
        "ln1_b": 0.1 * jax.random.normal(ks[1], (1, n_embd), jnp.float32),
        "ln2_g": 1.0 + 0.1 * jax.random.normal(ks[2], (1, n_embd), jnp.float32),
        "ln2_b": 0.1 * jax.random.normal(ks[3], (1, n_embd), jnp.float32),
        "wq": 0.05 * jax.random.normal(ks[4], (dim_att, n_embd), jnp.float32),
        "wk": 0.05 * jax.random.normal(ks[5], (dim_att, n_embd), jnp.float32),
        "wv": 0.05 * jax.random.normal(ks[6], (dim_att, n_embd), jnp.float32),
        "wo": 0.05 * jax.random.normal(ks[7], (n_embd, dim_att), jnp.float32),
        "wfc": 0.05 * jax.random.normal(ks[8], (dim_ffn, n_embd), jnp.float32),
        "wproj": 0.05 * jax.random.normal(ks[9], (n_embd, dim_ffn), jnp.float32),
    }

    x = jax.random.normal(ks[10], (B, T, n_embd), jnp.float32)
    image_features = jax.random.normal(ks[11], (B, S, n_embd), jnp.float32)

    ref = reference_forward(x, image_features, params,
                            n_head=n_head, head_size=head_size)

    # f32 MXU inputs: tight tolerance (only the approx softmax reciprocal differs).
    out = cross_attention_block(x, image_features, params,
                                n_head=n_head, head_size=head_size,
                                matmul_dtype=jnp.float32)
    out = jax.block_until_ready(out)
    assert out.shape == (B, T, n_embd)
    assert jnp.allclose(out, ref, atol=2e-3, rtol=2e-3), \
        f"f32 max abs diff {jnp.max(jnp.abs(out - ref))}"

    # bf16 MXU inputs (v6e/v7x fast path), f32 accumulation: looser tolerance.
    out_bf16 = cross_attention_block(x, image_features, params,
                                     n_head=n_head, head_size=head_size,
                                     matmul_dtype=jnp.bfloat16)
    out_bf16 = jax.block_until_ready(out_bf16)
    assert jnp.allclose(out_bf16, ref, atol=2e-2, rtol=2e-2), \
        f"bf16 max abs diff {jnp.max(jnp.abs(out_bf16 - ref))}"

    print("KERNEL_OK")
</pallas_src>

<mosaic_0001>
module attributes {stable_mosaic.version = 11 : i64} {
  func.func @cross_attn_block_kernel(%arg0: i32, %arg1: memref<2x8x32xf32, #tpu.memory_space<vmem>>, %arg2: memref<2x16x32xf32, #tpu.memory_space<vmem>>, %arg3: memref<1x32xf32, #tpu.memory_space<vmem>>, %arg4: memref<1x32xf32, #tpu.memory_space<vmem>>, %arg5: memref<1x32xf32, #tpu.memory_space<vmem>>, %arg6: memref<1x32xf32, #tpu.memory_space<vmem>>, %arg7: memref<32x32xf32, #tpu.memory_space<vmem>>, %arg8: memref<32x64xf32, #tpu.memory_space<vmem>>, %arg9: memref<32x32xf32, #tpu.memory_space<vmem>>, %arg10: memref<32x64xf32, #tpu.memory_space<vmem>>, %arg11: memref<64x32xf32, #tpu.memory_space<vmem>>, %arg12: memref<2x8x32xf32, #tpu.memory_space<vmem>>) attributes {dimension_semantics = [#tpu.dimension_semantics<arbitrary>], iteration_bounds = array<i64: 1>, scalar_prefetch = 0 : i64, scratch_operands = 0 : i64, tpu.core_type = #tpu.core_type<tc>, window_params = [{pipeline_mode = #tpu.pipeline_mode<synchronous>, transform_indices = @transform_0, window_bounds = array<i64: 2, 8, 32>}, {pipeline_mode = #tpu.pipeline_mode<synchronous>, transform_indices = @transform_1, window_bounds = array<i64: 2, 16, 32>}, {pipeline_mode = #tpu.pipeline_mode<synchronous>, transform_indices = @transform_2, window_bounds = array<i64: 1, 32>}, {pipeline_mode = #tpu.pipeline_mode<synchronous>, transform_indices = @transform_3, window_bounds = array<i64: 1, 32>}, {pipeline_mode = #tpu.pipeline_mode<synchronous>, transform_indices = @transform_4, window_bounds = array<i64: 1, 32>}, {pipeline_mode = #tpu.pipeline_mode<synchronous>, transform_indices = @transform_5, window_bounds = array<i64: 1, 32>}, {pipeline_mode = #tpu.pipeline_mode<synchronous>, transform_indices = @transform_6, window_bounds = array<i64: 32, 32>}, {pipeline_mode = #tpu.pipeline_mode<synchronous>, transform_indices = @transform_7, window_bounds = array<i64: 32, 64>}, {pipeline_mode = #tpu.pipeline_mode<synchronous>, transform_indices = @transform_8, window_bounds = array<i64: 32, 32>}, {pipeline_mode = #tpu.pipeline_mode<synchronous>, transform_indices = @transform_9, window_bounds = array<i64: 32, 64>}, {pipeline_mode = #tpu.pipeline_mode<synchronous>, transform_indices = @transform_10, window_bounds = array<i64: 64, 32>}, {pipeline_mode = #tpu.pipeline_mode<synchronous>, transform_indices = @transform_11, window_bounds = array<i64: 2, 8, 32>}]} {
    %c0 = arith.constant 0 : index
    %c0_0 = arith.constant 0 : index
    %c0_1 = arith.constant 0 : index
    %0 = vector.load %arg1[%c0, %c0_0, %c0_1] : memref<2x8x32xf32, #tpu.memory_space<vmem>>, vector<2x8x32xf32>
    %1 = vector.shape_cast %0 : vector<2x8x32xf32> to vector<16x32xf32>
    %c0_2 = arith.constant 0 : index
    %c0_3 = arith.constant 0 : index
    %c0_4 = arith.constant 0 : index
    %2 = vector.load %arg2[%c0_2, %c0_3, %c0_4] : memref<2x16x32xf32, #tpu.memory_space<vmem>>, vector<2x16x32xf32>
    %3 = vector.shape_cast %2 : vector<2x16x32xf32> to vector<32x32xf32>
    %c0_5 = arith.constant 0 : index
    %c0_6 = arith.constant 0 : index
    %4 = vector.load %arg3[%c0_5, %c0_6] : memref<1x32xf32, #tpu.memory_space<vmem>>, vector<1x32xf32>
    %c0_7 = arith.constant 0 : index
    %c0_8 = arith.constant 0 : index
    %5 = vector.load %arg4[%c0_7, %c0_8] : memref<1x32xf32, #tpu.memory_space<vmem>>, vector<1x32xf32>
    %cst = arith.constant dense<0.000000e+00> : vector<16xf32>
    %6 = vector.multi_reduction <add>, %1, %cst [1] : vector<16x32xf32> to vector<16xf32>
    %7 = vector.shape_cast %6 : vector<16xf32> to vector<16x1xf32>
    %cst_9 = arith.constant 3.200000e+01 : f32
    %8 = vector.broadcast %cst_9 : f32 to vector<16x1xf32>
    %9 = arith.divf %7, %8 : vector<16x1xf32>
    %10 = vector.broadcast %9 : vector<16x1xf32> to vector<16x32xf32>
    %11 = arith.subf %1, %10 : vector<16x32xf32>
    %12 = arith.mulf %11, %11 : vector<16x32xf32>
    %cst_10 = arith.constant dense<0.000000e+00> : vector<16xf32>
    %13 = vector.multi_reduction <add>, %12, %cst_10 [1] : vector<16x32xf32> to vector<16xf32>
    %14 = vector.shape_cast %13 : vector<16xf32> to vector<16x1xf32>
    %cst_11 = arith.constant 3.200000e+01 : f32
    %15 = vector.broadcast %cst_11 : f32 to vector<16x1xf32>
    %16 = arith.divf %14, %15 : vector<16x1xf32>
    %17 = vector.broadcast %9 : vector<16x1xf32> to vector<16x32xf32>
    %18 = arith.subf %1, %17 : vector<16x32xf32>
    %cst_12 = arith.constant 9.99999974E-6 : f32
    %19 = vector.broadcast %cst_12 : f32 to vector<16x1xf32>
    %20 = arith.addf %16, %19 : vector<16x1xf32>
    %21 = math.rsqrt %20 : vector<16x1xf32>
    %22 = vector.broadcast %21 : vector<16x1xf32> to vector<16x32xf32>
    %23 = arith.mulf %18, %22 : vector<16x32xf32>
    %24 = vector.broadcast %4 : vector<1x32xf32> to vector<16x32xf32>
    %25 = arith.mulf %23, %24 : vector<16x32xf32>
    %26 = vector.broadcast %5 : vector<1x32xf32> to vector<16x32xf32>
    %27 = arith.addf %25, %26 : vector<16x32xf32>
    %c0_13 = arith.constant 0 : index
    %c0_14 = arith.constant 0 : index
    %28 = vector.load %arg7[%c0_13, %c0_14] : memref<32x32xf32, #tpu.memory_space<vmem>>, vector<32x32xf32>
    %cst_15 = arith.constant dense<0.000000e+00> : vector<16x32xf32>
    %29 = tpu.matmul %27, %28, %cst_15 {dimension_numbers = #tpu.dot_dimension_numbers<[1], [0], [0], [1], [0, 0, 1, 1], [], []>} : vector<16x32xf32>, vector<32x32xf32>, vector<16x32xf32> -> vector<16x32xf32>
    %c0_16 = arith.constant 0 : index
    %c0_17 = arith.constant 0 : index
    %30 = vector.load %arg8[%c0_16, %c0_17] : memref<32x64xf32, #tpu.memory_space<vmem>>, vector<32x64xf32>
    %cst_18 = arith.constant dense<0.000000e+00> : vector<32x64xf32>
    %31 = tpu.matmul %3, %30, %cst_18 {dimension_numbers = #tpu.dot_dimension_numbers<[1], [0], [0], [1], [0, 0, 1, 1], [], []>} : vector<32x32xf32>, vector<32x64xf32>, vector<32x64xf32> -> vector<32x64xf32>
    %32 = vector.extract_strided_slice %31 {offsets = [0, 0], sizes = [32, 32], strides = [1, 1]} : vector<32x64xf32> to vector<32x32xf32>
    %33 = vector.extract_strided_slice %31 {offsets = [0, 32], sizes = [32, 32], strides = [1, 1]} : vector<32x64xf32> to vector<32x32xf32>
    %34 = vector.extract_strided_slice %29 {offsets = [0, 0], sizes = [8, 16], strides = [1, 1]} : vector<16x32xf32> to vector<8x16xf32>
    %35 = vector.extract_strided_slice %29 {offsets = [0, 16], sizes = [8, 16], strides = [1, 1]} : vector<16x32xf32> to vector<8x16xf32>
    %36 = vector.extract_strided_slice %29 {offsets = [8, 0], sizes = [8, 16], strides = [1, 1]} : vector<16x32xf32> to vector<8x16xf32>
    %37 = vector.extract_strided_slice %29 {offsets = [8, 16], sizes = [8, 16], strides = [1, 1]} : vector<16x32xf32> to vector<8x16xf32>
    %38 = vector.shape_cast %34 : vector<8x16xf32> to vector<1x8x16xf32>
    %39 = vector.shape_cast %35 : vector<8x16xf32> to vector<1x8x16xf32>
    %40 = vector.shape_cast %36 : vector<8x16xf32> to vector<1x8x16xf32>
    %41 = vector.shape_cast %37 : vector<8x16xf32> to vector<1x8x16xf32>
    %42 = tpu.concatenate %38, %39, %40, %41 in 0 : vector<1x8x16xf32>, vector<1x8x16xf32>, vector<1x8x16xf32>, vector<1x8x16xf32> -> vector<4x8x16xf32>
    %43 = vector.extract_strided_slice %32 {offsets = [0, 0], sizes = [16, 16], strides = [1, 1]} : vector<32x32xf32> to vector<16x16xf32>
    %44 = vector.extract_strided_slice %32 {offsets = [0, 16], sizes = [16, 16], strides = [1, 1]} : vector<32x32xf32> to vector<16x16xf32>
    %45 = vector.extract_strided_slice %32 {offsets = [16, 0], sizes = [16, 16], strides = [1, 1]} : vector<32x32xf32> to vector<16x16xf32>
    %46 = vector.extract_strided_slice %32 {offsets = [16, 16], sizes = [16, 16], strides = [1, 1]} : vector<32x32xf32> to vector<16x16xf32>
    %47 = vector.shape_cast %43 : vector<16x16xf32> to vector<1x16x16xf32>
    %48 = vector.shape_cast %44 : vector<16x16xf32> to vector<1x16x16xf32>
    %49 = vector.shape_cast %45 : vector<16x16xf32> to vector<1x16x16xf32>
    %50 = vector.shape_cast %46 : vector<16x16xf32> to vector<1x16x16xf32>
    %51 = tpu.concatenate %47, %48, %49, %50 in 0 : vector<1x16x16xf32>, vector<1x16x16xf32>, vector<1x16x16xf32>, vector<1x16x16xf32> -> vector<4x16x16xf32>
    %52 = vector.extract_strided_slice %33 {offsets = [0, 0], sizes = [16, 16], strides = [1, 1]} : vector<32x32xf32> to vector<16x16xf32>
    %53 = vector.extract_strided_slice %33 {offsets = [0, 16], sizes = [16, 16], strides = [1, 1]} : vector<32x32xf32> to vector<16x16xf32>
    %54 = vector.extract_strided_slice %33 {offsets = [16, 0], sizes = [16, 16], strides = [1, 1]} : vector<32x32xf32> to vector<16x16xf32>
    %55 = vector.extract_strided_slice %33 {offsets = [16, 16], sizes = [16, 16], strides = [1, 1]} : vector<32x32xf32> to vector<16x16xf32>
    %56 = vector.shape_cast %52 : vector<16x16xf32> to vector<1x16x16xf32>
    %57 = vector.shape_cast %53 : vector<16x16xf32> to vector<1x16x16xf32>
    %58 = vector.shape_cast %54 : vector<16x16xf32> to vector<1x16x16xf32>
    %59 = vector.shape_cast %55 : vector<16x16xf32> to vector<1x16x16xf32>
    %60 = tpu.concatenate %56, %57, %58, %59 in 0 : vector<1x16x16xf32>, vector<1x16x16xf32>, vector<1x16x16xf32>, vector<1x16x16xf32> -> vector<4x16x16xf32>
    "tpu.trace_start"() <{level = 10 : i32, message = "bqd,bkd->bqk"}> : () -> ()
    %cst_19 = arith.constant dense<0.000000e+00> : vector<4x8x16xf32>
    %61 = tpu.matmul %42, %51, %cst_19 {dimension_numbers = #tpu.dot_dimension_numbers<[2], [2], [1], [1], [0, 0, 0, 1, 1, 1], [0], [0]>} : vector<4x8x16xf32>, vector<4x16x16xf32>, vector<4x8x16xf32> -> vector<4x8x16xf32>
    "tpu.trace_stop"() : () -> ()
    %cst_20 = arith.constant dense<0xFF800000> : vector<4x8xf32>
    %62 = vector.multi_reduction <maximumf>, %61, %cst_20 [2] : vector<4x8x16xf32> to vector<4x8xf32>
    %63 = vector.shape_cast %62 : vector<4x8xf32> to vector<4x8x1xf32>
    %64 = vector.broadcast %63 : vector<4x8x1xf32> to vector<4x8x16xf32>
    %65 = arith.subf %61, %64 : vector<4x8x16xf32>
    %66 = math.exp %65 : vector<4x8x16xf32>
    %cst_21 = arith.constant dense<0.000000e+00> : vector<4x8xf32>
    %67 = vector.multi_reduction <add>, %66, %cst_21 [2] : vector<4x8x16xf32> to vector<4x8xf32>
    %68 = vector.shape_cast %67 : vector<4x8xf32> to vector<4x8x1xf32>
    %69 = tpu.reciprocal %68 {approx = true} : vector<4x8x1xf32> -> vector<4x8x1xf32>
    %70 = vector.broadcast %69 : vector<4x8x1xf32> to vector<4x8x16xf32>
    %71 = arith.mulf %66, %70 : vector<4x8x16xf32>
    "tpu.trace_start"() <{level = 10 : i32, message = "bqk,bkd->bqd"}> : () -> ()
    %cst_22 = arith.constant dense<0.000000e+00> : vector<4x8x16xf32>
    %72 = tpu.matmul %71, %60, %cst_22 {dimension_numbers = #tpu.dot_dimension_numbers<[2], [1], [1], [2], [0, 0, 0, 1, 1, 2], [0], [0]>} : vector<4x8x16xf32>, vector<4x16x16xf32>, vector<4x8x16xf32> -> vector<4x8x16xf32>
    "tpu.trace_stop"() : () -> ()
    %73 = vector.extract_strided_slice %72 {offsets = [0, 0, 0], sizes = [1, 8, 16], strides = [1, 1, 1]} : vector<4x8x16xf32> to vector<1x8x16xf32>
    %74 = vector.shape_cast %73 : vector<1x8x16xf32> to vector<8x16xf32>
    %75 = vector.extract_strided_slice %72 {offsets = [1, 0, 0], sizes = [1, 8, 16], strides = [1, 1, 1]} : vector<4x8x16xf32> to vector<1x8x16xf32>
    %76 = vector.shape_cast %75 : vector<1x8x16xf32> to vector<8x16xf32>
    %77 = tpu.concatenate %74, %76 in 1 : vector<8x16xf32>, vector<8x16xf32> -> vector<8x32xf32>
    %78 = vector.extract_strided_slice %72 {offsets = [2, 0, 0], sizes = [1, 8, 16], strides = [1, 1, 1]} : vector<4x8x16xf32> to vector<1x8x16xf32>
    %79 = vector.shape_cast %78 : vector<1x8x16xf32> to vector<8x16xf32>
    %80 = vector.extract_strided_slice %72 {offsets = [3, 0, 0], sizes = [1, 8, 16], strides = [1, 1, 1]} : vector<4x8x16xf32> to vector<1x8x16xf32>
    %81 = vector.shape_cast %80 : vector<1x8x16xf32> to vector<8x16xf32>
    %82 = tpu.concatenate %79, %81 in 1 : vector<8x16xf32>, vector<8x16xf32> -> vector<8x32xf32>
    %83 = tpu.concatenate %77, %82 in 0 : vector<8x32xf32>, vector<8x32xf32> -> vector<16x32xf32>
    %c0_23 = arith.constant 0 : index
    %c0_24 = arith.constant 0 : index
    %84 = vector.load %arg9[%c0_23, %c0_24] : memref<32x32xf32, #tpu.memory_space<vmem>>, vector<32x32xf32>
    %cst_25 = arith.constant dense<0.000000e+00> : vector<16x32xf32>
    %85 = tpu.matmul %83, %84, %cst_25 {dimension_numbers = #tpu.dot_dimension_numbers<[1], [0], [0], [1], [0, 0, 1, 1], [], []>} : vector<16x32xf32>, vector<32x32xf32>, vector<16x32xf32> -> vector<16x32xf32>
    %86 = arith.addf %1, %85 : vector<16x32xf32>
    %c0_26 = arith.constant 0 : index
    %c0_27 = arith.constant 0 : index
    %87 = vector.load %arg5[%c0_26, %c0_27] : memref<1x32xf32, #tpu.memory_space<vmem>>, vector<1x32xf32>
    %c0_28 = arith.constant 0 : index
    %c0_29 = arith.constant 0 : index
    %88 = vector.load %arg6[%c0_28, %c0_29] : memref<1x32xf32, #tpu.memory_space<vmem>>, vector<1x32xf32>
    %cst_30 = arith.constant dense<0.000000e+00> : vector<16xf32>
    %89 = vector.multi_reduction <add>, %86, %cst_30 [1] : vector<16x32xf32> to vector<16xf32>
    %90 = vector.shape_cast %89 : vector<16xf32> to vector<16x1xf32>
    %cst_31 = arith.constant 3.200000e+01 : f32
    %91 = vector.broadcast %cst_31 : f32 to vector<16x1xf32>
    %92 = arith.divf %90, %91 : vector<16x1xf32>
    %93 = vector.broadcast %92 : vector<16x1xf32> to vector<16x32xf32>
    %94 = arith.subf %86, %93 : vector<16x32xf32>
    %95 = arith.mulf %94, %94 : vector<16x32xf32>
    %cst_32 = arith.constant dense<0.000000e+00> : vector<16xf32>
    %96 = vector.multi_reduction <add>, %95, %cst_32 [1] : vector<16x32xf32> to vector<16xf32>
    %97 = vector.shape_cast %96 : vector<16xf32> to vector<16x1xf32>
    %cst_33 = arith.constant 3.200000e+01 : f32
    %98 = vector.broadcast %cst_33 : f32 to vector<16x1xf32>
    %99 = arith.divf %97, %98 : vector<16x1xf32>
    %100 = vector.broadcast %92 : vector<16x1xf32> to vector<16x32xf32>
    %101 = arith.subf %86, %100 : vector<16x32xf32>
    %cst_34 = arith.constant 9.99999974E-6 : f32
    %102 = vector.broadcast %cst_34 : f32 to vector<16x1xf32>
    %103 = arith.addf %99, %102 : vector<16x1xf32>
    %104 = math.rsqrt %103 : vector<16x1xf32>
    %105 = vector.broadcast %104 : vector<16x1xf32> to vector<16x32xf32>
    %106 = arith.mulf %101, %105 : vector<16x32xf32>
    %107 = vector.broadcast %87 : vector<1x32xf32> to vector<16x32xf32>
    %108 = arith.mulf %106, %107 : vector<16x32xf32>
    %109 = vector.broadcast %88 : vector<1x32xf32> to vector<16x32xf32>
    %110 = arith.addf %108, %109 : vector<16x32xf32>
    %c0_35 = arith.constant 0 : index
    %c0_36 = arith.constant 0 : index
    %111 = vector.load %arg10[%c0_35, %c0_36] : memref<32x64xf32, #tpu.memory_space<vmem>>, vector<32x64xf32>
    %cst_37 = arith.constant dense<0.000000e+00> : vector<16x64xf32>
    %112 = tpu.matmul %110, %111, %cst_37 {dimension_numbers = #tpu.dot_dimension_numbers<[1], [0], [0], [1], [0, 0, 1, 1], [], []>} : vector<16x32xf32>, vector<32x64xf32>, vector<16x64xf32> -> vector<16x64xf32>
    %cst_38 = arith.constant 0.000000e+00 : f32
    %113 = vector.broadcast %cst_38 : f32 to vector<16x64xf32>
    %114 = arith.maximumf %112, %113 : vector<16x64xf32>
    %c0_39 = arith.constant 0 : index
    %c0_40 = arith.constant 0 : index
    %115 = vector.load %arg11[%c0_39, %c0_40] : memref<64x32xf32, #tpu.memory_space<vmem>>, vector<64x32xf32>
    %cst_41 = arith.constant dense<0.000000e+00> : vector<16x32xf32>
    %116 = tpu.matmul %114, %115, %cst_41 {dimension_numbers = #tpu.dot_dimension_numbers<[1], [0], [0], [1], [0, 0, 1, 1], [], []>} : vector<16x64xf32>, vector<64x32xf32>, vector<16x32xf32> -> vector<16x32xf32>
    %117 = arith.addf %86, %116 : vector<16x32xf32>
    %118 = vector.shape_cast %117 : vector<16x32xf32> to vector<2x8x32xf32>
    %c0_42 = arith.constant 0 : index
    %c0_43 = arith.constant 0 : index
    %c0_44 = arith.constant 0 : index
    %119 = vector.load %arg12[%c0_42, %c0_43, %c0_44] : memref<2x8x32xf32, #tpu.memory_space<vmem>>, vector<2x8x32xf32>
    tpu.vector_store %arg12[%c0_42, %c0_43, %c0_44], %118 {strides = array<i32>} : memref<2x8x32xf32, #tpu.memory_space<vmem>>, vector<2x8x32xf32>,
    return
  }
  func.func @transform_0(%arg0: i32) -> (i32, i32, i32) {
    %c0_i32 = arith.constant 0 : i32
    %c0_i32_0 = arith.constant 0 : i32
    %c0_i32_1 = arith.constant 0 : i32
    %c0_i32_2 = arith.constant 0 : i32
    return %c0_i32, %c0_i32_0, %c0_i32_1 : i32, i32, i32
  }
  func.func @transform_1(%arg0: i32) -> (i32, i32, i32) {
    %c0_i32 = arith.constant 0 : i32
    %c0_i32_0 = arith.constant 0 : i32
    %c0_i32_1 = arith.constant 0 : i32
    %c0_i32_2 = arith.constant 0 : i32
    return %c0_i32, %c0_i32_0, %c0_i32_1 : i32, i32, i32
  }
  func.func @transform_2(%arg0: i32) -> (i32, i32) {
    %c0_i32 = arith.constant 0 : i32
    %c0_i32_0 = arith.constant 0 : i32
    %c0_i32_1 = arith.constant 0 : i32
    return %c0_i32, %c0_i32_0 : i32, i32
  }
  func.func @transform_3(%arg0: i32) -> (i32, i32) {
    %c0_i32 = arith.constant 0 : i32
    %c0_i32_0 = arith.constant 0 : i32
    %c0_i32_1 = arith.constant 0 : i32
    return %c0_i32, %c0_i32_0 : i32, i32
  }
  func.func @transform_4(%arg0: i32) -> (i32, i32) {
    %c0_i32 = arith.constant 0 : i32
    %c0_i32_0 = arith.constant 0 : i32
    %c0_i32_1 = arith.constant 0 : i32
    return %c0_i32, %c0_i32_0 : i32, i32
  }
  func.func @transform_5(%arg0: i32) -> (i32, i32) {
    %c0_i32 = arith.constant 0 : i32
    %c0_i32_0 = arith.constant 0 : i32
    %c0_i32_1 = arith.constant 0 : i32
    return %c0_i32, %c0_i32_0 : i32, i32
  }
  func.func @transform_6(%arg0: i32) -> (i32, i32) {
    %c0_i32 = arith.constant 0 : i32
    %c0_i32_0 = arith.constant 0 : i32
    %c0_i32_1 = arith.constant 0 : i32
    return %c0_i32, %c0_i32_0 : i32, i32
  }
  func.func @transform_7(%arg0: i32) -> (i32, i32) {
    %c0_i32 = arith.constant 0 : i32
    %c0_i32_0 = arith.constant 0 : i32
    %c0_i32_1 = arith.constant 0 : i32
    return %c0_i32, %c0_i32_0 : i32, i32
  }
  func.func @transform_8(%arg0: i32) -> (i32, i32) {
    %c0_i32 = arith.constant 0 : i32
    %c0_i32_0 = arith.constant 0 : i32
    %c0_i32_1 = arith.constant 0 : i32
    return %c0_i32, %c0_i32_0 : i32, i32
  }
  func.func @transform_9(%arg0: i32) -> (i32, i32) {
    %c0_i32 = arith.constant 0 : i32
    %c0_i32_0 = arith.constant 0 : i32
    %c0_i32_1 = arith.constant 0 : i32
    return %c0_i32, %c0_i32_0 : i32, i32
  }
  func.func @transform_10(%arg0: i32) -> (i32, i32) {
    %c0_i32 = arith.constant 0 : i32
    %c0_i32_0 = arith.constant 0 : i32
    %c0_i32_1 = arith.constant 0 : i32
    return %c0_i32, %c0_i32_0 : i32, i32
  }
  func.func @transform_11(%arg0: i32) -> (i32, i32, i32) {
    %c0_i32 = arith.constant 0 : i32
    %c0_i32_0 = arith.constant 0 : i32
    %c0_i32_1 = arith.constant 0 : i32
    %c0_i32_2 = arith.constant 0 : i32
    return %c0_i32, %c0_i32_0, %c0_i32_1 : i32, i32, i32
  }
}

</mosaic_0001>

<llo_original>
// kernel: tpu_custom_call.1
$region0: #{tpu_custom_call.1}
  #allocation0 [shape = 'u32[]', space=smem, size = 0x4, offset = 0x4, fixed_abs, tag = 'smem constant byte address 0x4 - core index']
  #allocation1 [shape = 'u32[144,128]{1,0:T(1,128)}', space=vmem, size = 0x12000, scoped, tag = 'internal scratch']
  %s0 = inlined_call_operand.hbm [shape: f32[2,8,32], index: 0, kind: input, shape index: {}]
  %s1 = inlined_call_operand.vmem [shape: f32[2,16,32], index: 1, kind: input, shape index: {}]
  %s2 = inlined_call_operand.vmem [shape: f32[1,32], index: 2, kind: input, shape index: {}]
  %s3 = inlined_call_operand.vmem [shape: f32[1,32], index: 3, kind: input, shape index: {}]
  %s4 = inlined_call_operand.vmem [shape: f32[1,32], index: 4, kind: input, shape index: {}]
  %s5 = inlined_call_operand.vmem [shape: f32[1,32], index: 5, kind: input, shape index: {}]
  %s6 = inlined_call_operand.vmem [shape: f32[32,32], index: 6, kind: input, shape index: {}]
  %s7 = inlined_call_operand.vmem [shape: f32[32,64], index: 7, kind: input, shape index: {}]
  %s8 = inlined_call_operand.hbm [shape: f32[32,32], index: 8, kind: input, shape index: {}]
  %s9 = inlined_call_operand.hbm [shape: f32[32,64], index: 9, kind: input, shape index: {}]
  %s10 = inlined_call_operand.vmem [shape: f32[64,32], index: 10, kind: input, shape index: {}]
  %s11 = inlined_call_operand.hbm [shape: f32[2,8,32], index: 11, kind: output, shape index: {}]
  %s12 = sld [smem:[#allocation0]]
  $region66: #{tpu_custom_call.1} parent=0
    _
  %s14 = ssub.s32 1, %s12
  %s15 = scalar_select 0, %s14, %s12
  $region1: #{tpu_custom_call.1} parent=0
    #allocation2 [shape = 'u8[8192]{0}', space=vmem, size = 0x2000, scoped, tag = 'input window, operand 0, single buffered']
    #allocation3 [shape = 's32[1]{0}', space=sflag, size = 0x4, scoped, tag = 'scoped memory for tpu_custom_call.1']
    #allocation4 [shape = 's32[1]{0}', space=sflag, size = 0x4, scoped, tag = 'scoped memory for tpu_custom_call.1']
    #allocation5 [shape = 'u8[16384]{0}', space=vmem, size = 0x4000, scoped, tag = 'input window, operand 8, single buffered']
    #allocation6 [shape = 's32[1]{0}', space=sflag, size = 0x4, scoped, tag = 'scoped memory for tpu_custom_call.1']
    #allocation7 [shape = 'u8[16384]{0}', space=vmem, size = 0x4000, scoped, tag = 'input window, operand 9, single buffered']
    #allocation8 [shape = 'u8[8192]{0}', space=vmem, size = 0x2000, scoped, tag = 'output window, operand 0, single buffered']
    %16 = vsyncpa [#allocation3], 0
    %17 = vsyncpa [#allocation6], 0
    %18 = vsyncpa [#allocation4], 0
    // Predicated region
    $region2: #{tpu_custom_call.1} parent=1 // pred_check
      _
    $region3: #{tpu_custom_call.1} parent=1 // pred_check_branch
      %20 = sbr.rel (0) target = $region5
    $region4: #{tpu_custom_call.1} parent=1 // pred_region
      %s22 = ssub.s32 256, 256
      %23 = vsyncadd [#allocation3], %s22
      %s24 = sshll.u32 [#allocation2], 4
      %s25 = int_to_ptr.vmem [resolvable:$true] %s24
      %30 = dma.hbm_to_vmem [thread:$0]  %s0, 256, %s25, [#allocation3], 128, 128, 8
    $region5: #{tpu_custom_call.1} parent=1 // pred_fallthru
      _
    // Predicated region
    $region6: #{tpu_custom_call.1} parent=1 // pred_check
      _
    $region7: #{tpu_custom_call.1} parent=1 // pred_check_branch
      %32 = sbr.rel (0) target = $region9
    $region8: #{tpu_custom_call.1} parent=1 // pred_region
      _
    $region9: #{tpu_custom_call.1} parent=1 // pred_fallthru
      _
    // Predicated region
    $region10: #{tpu_custom_call.1} parent=1 // pred_check
      _
    $region11: #{tpu_custom_call.1} parent=1 // pred_check_branch
      %34 = sbr.rel (0) target = $region13
    $region12: #{tpu_custom_call.1} parent=1 // pred_region
      _
    $region13: #{tpu_custom_call.1} parent=1 // pred_fallthru
      _
    // Predicated region
    $region14: #{tpu_custom_call.1} parent=1 // pred_check
      _
    $region15: #{tpu_custom_call.1} parent=1 // pred_check_branch
      %36 = sbr.rel (0) target = $region17
    $region16: #{tpu_custom_call.1} parent=1 // pred_region
      _
    $region17: #{tpu_custom_call.1} parent=1 // pred_fallthru
      _
    // Predicated region
    $region18: #{tpu_custom_call.1} parent=1 // pred_check
      _
    $region19: #{tpu_custom_call.1} parent=1 // pred_check_branch
      %38 = sbr.rel (0) target = $region21
    $region20: #{tpu_custom_call.1} parent=1 // pred_region
      _
    $region21: #{tpu_custom_call.1} parent=1 // pred_fallthru
      _
    // Predicated region
    $region22: #{tpu_custom_call.1} parent=1 // pred_check
      _
    $region23: #{tpu_custom_call.1} parent=1 // pred_check_branch
      %40 = sbr.rel (0) target = $region25
    $region24: #{tpu_custom_call.1} parent=1 // pred_region
      _
    $region25: #{tpu_custom_call.1} parent=1 // pred_fallthru
      _
    // Predicated region
    $region26: #{tpu_custom_call.1} parent=1 // pred_check
      _
    $region27: #{tpu_custom_call.1} parent=1 // pred_check_branch
      %42 = sbr.rel (0) target = $region29
    $region28: #{tpu_custom_call.1} parent=1 // pred_region
      _
    $region29: #{tpu_custom_call.1} parent=1 // pred_fallthru
      _
    // Predicated region
    $region30: #{tpu_custom_call.1} parent=1 // pred_check
      _
    $region31: #{tpu_custom_call.1} parent=1 // pred_check_branch
      %44 = sbr.rel (0) target = $region33
    $region32: #{tpu_custom_call.1} parent=1 // pred_region
      _
    $region33: #{tpu_custom_call.1} parent=1 // pred_fallthru
      _
    // Predicated region
    $region34: #{tpu_custom_call.1} parent=1 // pred_check
      _
    $region35: #{tpu_custom_call.1} parent=1 // pred_check_branch
      %46 = sbr.rel (0) target = $region37
    $region36: #{tpu_custom_call.1} parent=1 // pred_region
      %s48 = ssub.s32 512, 512
      %49 = vsyncadd [#allocation6], %s48
      %s50 = sshll.u32 [#allocation5], 4
      %s51 = int_to_ptr.vmem [resolvable:$true] %s50
      %56 = dma.hbm_to_vmem [thread:$0]  %s8, 512, %s51, [#allocation6], 128, 128, 8
    $region37: #{tpu_custom_call.1} parent=1 // pred_fallthru
      _
    // Predicated region
    $region38: #{tpu_custom_call.1} parent=1 // pred_check
      _
    $region39: #{tpu_custom_call.1} parent=1 // pred_check_branch
      %58 = sbr.rel (0) target = $region41
    $region40: #{tpu_custom_call.1} parent=1 // pred_region
      %s60 = ssub.s32 512, 512
      %61 = vsyncadd [#allocation6], %s60
      %s62 = sshll.u32 [#allocation7], 4
      %s63 = int_to_ptr.vmem [resolvable:$true] %s62
      %68 = dma.hbm_to_vmem [thread:$0]  %s9, 512, %s63, [#allocation6], 128, 128, 8
    $region41: #{tpu_custom_call.1} parent=1 // pred_fallthru
      _
    // Predicated region
    $region42: #{tpu_custom_call.1} parent=1 // pred_check
      _
    $region43: #{tpu_custom_call.1} parent=1 // pred_check_branch
      %70 = sbr.rel (0) target = $region45
    $region44: #{tpu_custom_call.1} parent=1 // pred_region
      _
    $region45: #{tpu_custom_call.1} parent=1 // pred_fallthru
      _
    // Predicated region
    $region46: #{tpu_custom_call.1} parent=1 // pred_check
      _
    $region47: #{tpu_custom_call.1} parent=1 // pred_check_branch
      %72 = sbr.rel (0) target = $region49
    $region48: #{tpu_custom_call.1} parent=1 // pred_region
      %73 = dma.done [#allocation3], 256
    $region49: #{tpu_custom_call.1} parent=1 // pred_fallthru
      _
    // Predicated region
    $region50: #{tpu_custom_call.1} parent=1 // pred_check
      _
    $region51: #{tpu_custom_call.1} parent=1 // pred_check_branch
      %75 = sbr.rel (0) target = $region53
    $region52: #{tpu_custom_call.1} parent=1 // pred_region
      %76 = dma.done [#allocation6], 512
    $region53: #{tpu_custom_call.1} parent=1 // pred_fallthru
      _
    // Predicated region
    $region54: #{tpu_custom_call.1} parent=1 // pred_check
      _
    $region55: #{tpu_custom_call.1} parent=1 // pred_check_branch
      %78 = sbr.rel (0) target = $region57
    $region56: #{tpu_custom_call.1} parent=1 // pred_region
      %79 = dma.done [#allocation6], 512
    $region57: #{tpu_custom_call.1} parent=1 // pred_fallthru
      _
    %v80 = vld [vmem:[#allocation2] sm:$0xff]
    %v81 = vld [vmem:[#allocation2 + $0x8] sm:$0xff]
    %v82 = vld [vmem:[%s1] sm:$0xff]
    %v83 = vld [vmem:[%s1 + $0x8] sm:$0xff]
    %v84 = vld [vmem:[%s1 + $0x10] sm:$0xff]
    %v85 = vld [vmem:[%s1 + $0x18] sm:$0xff]
    %v86 = vld [vmem:[%s2] sm:$0x1]
    %v87 = vld [vmem:[%s3] sm:$0x1]
    %vm88 = vcmask 261120
    %v89 = vsel %vm88, %v80, 0.0
    %90 = vadd.xlane.f32.xlu0 %v89
    %v91 = vpop.xlane.xlu0 %90
    %v92 = vsel %vm88, %v81, 0.0
    %93 = vadd.xlane.f32.xlu0 %v92
    %v94 = vpop.xlane.xlu0 %93
    %v95 = vrcp.pop 32.0
    %v96 = vmul.f32 %v91, %v95
    %v97 = vmul.f32 %v94, %v95
    %v98 = vsub.f32 %v80, %v96
    %v99 = vsub.f32 %v81, %v97
    %v100 = vmul.f32 %v98, %v98
    %v101 = vmul.f32 %v99, %v99
    %v102 = vsel %vm88, %v100, 0.0
    %103 = vadd.xlane.f32.xlu0 %v102
    %v104 = vpop.xlane.xlu0 %103
    %v105 = vsel %vm88, %v101, 0.0
    %106 = vadd.xlane.f32.xlu0 %v105
    %v107 = vpop.xlane.xlu0 %106
    %v108 = vmul.f32 %v104, %v95
    %v109 = vmul.f32 %v107, %v95
    %v110 = vadd.f32 %v108, 1e-05
    %v111 = vadd.f32 %v109, 1e-05
    %v112 = vrsqrt.pop %v110
    %v113 = vrsqrt.pop %v111
    %v114 = vmul.f32 %v98, %v112
    %v115 = vmul.f32 %v99, %v113
    %v117 = vlaneseq
    %v118 = vshrl.u32 %v117, 7
    %v119 = vsub.s32 0, %v118
    %v120 = vrot.slane %v86, %v119
    %v122 = vmul.f32 %v114, %v120
    %v123 = vmul.f32 %v115, %v120
    %v125 = vlaneseq
    %v126 = vshrl.u32 %v125, 7
    %v127 = vsub.s32 0, %v126
    %v128 = vrot.slane %v87, %v127
    %v130 = vadd.f32 %v122, %v128
    %v131 = vadd.f32 %v123, %v128
    %v132 = vld [vmem:[%s6] sm:$0xff]
    %v133 = vld [vmem:[%s6 + $0x8] sm:$0xff]
    %v134 = vld [vmem:[%s6 + $0x10] sm:$0xff]
    %v135 = vld [vmem:[%s6 + $0x18] sm:$0xff]
    %v137 = vsel %vm88, %v130, 0
    %v140 = vsel %vm88, %v131, 0
    %142 = vmatprep.subr.mxu0 0.0
    %143 = vmatpush1.msra.mxu0 0.0
    %144 = vmatprep.subr.mxu0 0.0
    %145 = vmatpush1.msra.mxu0 0.0
    %146 = vmatprep.subr.mxu0 0.0
    %147 = vmatpush1.msra.mxu0 0.0
    %148 = vmatprep.subr.mxu0 0.0
    %149 = vmatpush1.msra.mxu0 0.0
    %150 = vmatprep.subr.mxu0 0.0
    %151 = vmatpush1.msra.mxu0 0.0
    %152 = vmatprep.subr.mxu0 0.0
    %153 = vmatpush1.msra.mxu0 0.0
    %154 = vmatprep.subr.mxu0 0.0
    %155 = vmatpush1.msra.mxu0 0.0
    %156 = vmatprep.subr.mxu0 0.0
    %157 = vmatpush1.msra.mxu0 0.0
    %158 = vmatprep.subr.mxu0 0.0
    %159 = vmatpush1.msra.mxu0 0.0
    %160 = vmatprep.subr.mxu0 0.0
    %161 = vmatpush1.msra.mxu0 0.0
    %162 = vmatprep.subr.mxu0 0.0
    %163 = vmatpush1.msra.mxu0 0.0
    %164 = vmatprep.subr.mxu0 0.0
    %165 = vmatpush1.msra.mxu0 0.0
    %166 = vmatprep.subr.mxu0 0.0
    %167 = vmatpush1.msra.mxu0 %v135
    %168 = vmatprep.subr.mxu0 0.0
    %169 = vmatpush1.msra.mxu0 %v134
    %170 = vmatprep.subr.mxu0 0.0
    %171 = vmatpush1.msra.mxu0 %v133
    %172 = vmatprep.subr.mxu0 0.0
    %173 = vmatpush1.msra.mxu0 %v132
    %174 = vmatprep.subr.mxu0 0.0
    %175 = vmatpush2.msra.mxu0 0.0
    %176 = vmatprep.subr.mxu0 0.0
    %177 = vmatpush2.msra.mxu0 0.0
    %178 = vmatprep.subr.mxu0 0.0
    %179 = vmatpush2.msra.mxu0 0.0
    %180 = vmatprep.subr.mxu0 0.0
    %181 = vmatpush2.msra.mxu0 0.0
    %182 = vmatprep.subr.mxu0 0.0
    %183 = vmatpush2.msra.mxu0 0.0
    %184 = vmatprep.subr.mxu0 0.0
    %185 = vmatpush2.msra.mxu0 0.0
    %186 = vmatprep.subr.mxu0 0.0
    %187 = vmatpush2.msra.mxu0 0.0
    %188 = vmatprep.subr.mxu0 0.0
    %189 = vmatpush2.msra.mxu0 0.0
    %190 = vmatprep.subr.mxu0 0.0
    %191 = vmatpush2.msra.mxu0 0.0
    %192 = vmatprep.subr.mxu0 0.0
    %193 = vmatpush2.msra.mxu0 0.0
    %194 = vmatprep.subr.mxu0 0.0
    %195 = vmatpush2.msra.mxu0 0.0
    %196 = vmatprep.subr.mxu0 0.0
    %197 = vmatpush2.msra.mxu0 0.0
    %198 = vmatprep.subr.mxu0 0.0
    %199 = vmatpush2.msra.mxu0 0.0
    %200 = vmatprep.subr.mxu0 0.0
    %201 = vmatpush2.msra.mxu0 0.0
    %202 = vmatprep.subr.mxu0 0.0
    %203 = vmatpush2.msra.mxu0 0.0
    %204 = vmatprep.subr.mxu0 0.0
    %205 = vmatpush2.msra.mxu0 0.0
    %206 = vmatprep.mubr.f32.mxu0 0.0
    %207 = vmatmul.mubr.f32.gmra.mxu0 %v137
    %v208 = vpop.f32.mrf.mxu0
    %v209 = vadd.f32 0.0, %v208
    %v210 = vpop.f32.mrf.mxu0
    %211 = vmatprep.mubr.f32.mxu0 0.0
    %212 = vmatmul.mubr.f32.gmra.mxu0 %v140
    %v213 = vpop.f32.mrf.mxu0
    %v214 = vadd.f32 0.0, %v213
    %v215 = vpop.f32.mrf.mxu0
    %216 = vdwg.mxu0
    %v217 = vld [vmem:[%s7] sm:$0xff]
    %v218 = vld [vmem:[%s7 + $0x8] sm:$0xff]
    %v219 = vld [vmem:[%s7 + $0x10] sm:$0xff]
    %v220 = vld [vmem:[%s7 + $0x18] sm:$0xff]
    %v222 = vsel %vm88, %v82, 0
    %v225 = vsel %vm88, %v83, 0
    %v228 = vsel %vm88, %v84, 0
    %v231 = vsel %vm88, %v85, 0
    %233 = vmatprep.subr.mxu0 0.0
    %234 = vmatpush1.msra.mxu0 0.0
    %235 = vmatprep.subr.mxu0 0.0
    %236 = vmatpush1.msra.mxu0 0.0
    %237 = vmatprep.subr.mxu0 0.0
    %238 = vmatpush1.msra.mxu0 0.0
    %239 = vmatprep.subr.mxu0 0.0
    %240 = vmatpush1.msra.mxu0 0.0
    %241 = vmatprep.subr.mxu0 0.0
    %242 = vmatpush1.msra.mxu0 0.0
    %243 = vmatprep.subr.mxu0 0.0
    %244 = vmatpush1.msra.mxu0 0.0
    %245 = vmatprep.subr.mxu0 0.0
    %246 = vmatpush1.msra.mxu0 0.0
    %247 = vmatprep.subr.mxu0 0.0
    %248 = vmatpush1.msra.mxu0 0.0
    %249 = vmatprep.subr.mxu0 0.0
    %250 = vmatpush1.msra.mxu0 0.0
    %251 = vmatprep.subr.mxu0 0.0
    %252 = vmatpush1.msra.mxu0 0.0
    %253 = vmatprep.subr.mxu0 0.0
    %254 = vmatpush1.msra.mxu0 0.0
    %255 = vmatprep.subr.mxu0 0.0
    %256 = vmatpush1.msra.mxu0 0.0
    %257 = vmatprep.subr.mxu0 0.0
    %258 = vmatpush1.msra.mxu0 %v220
    %259 = vmatprep.subr.mxu0 0.0
    %260 = vmatpush1.msra.mxu0 %v219
    %261 = vmatprep.subr.mxu0 0.0
    %262 = vmatpush1.msra.mxu0 %v218
    %263 = vmatprep.subr.mxu0 0.0
    %264 = vmatpush1.msra.mxu0 %v217
    %265 = vmatprep.subr.mxu0 0.0
    %266 = vmatpush2.msra.mxu0 0.0
    %267 = vmatprep.subr.mxu0 0.0
    %268 = vmatpush2.msra.mxu0 0.0
    %269 = vmatprep.subr.mxu0 0.0
    %270 = vmatpush2.msra.mxu0 0.0
    %271 = vmatprep.subr.mxu0 0.0
    %272 = vmatpush2.msra.mxu0 0.0
    %273 = vmatprep.subr.mxu0 0.0
    %274 = vmatpush2.msra.mxu0 0.0
    %275 = vmatprep.subr.mxu0 0.0
    %276 = vmatpush2.msra.mxu0 0.0
    %277 = vmatprep.subr.mxu0 0.0
    %278 = vmatpush2.msra.mxu0 0.0
    %279 = vmatprep.subr.mxu0 0.0
    %280 = vmatpush2.msra.mxu0 0.0
    %281 = vmatprep.subr.mxu0 0.0
    %282 = vmatpush2.msra.mxu0 0.0
    %283 = vmatprep.subr.mxu0 0.0
    %284 = vmatpush2.msra.mxu0 0.0
    %285 = vmatprep.subr.mxu0 0.0
    %286 = vmatpush2.msra.mxu0 0.0
    %287 = vmatprep.subr.mxu0 0.0
    %288 = vmatpush2.msra.mxu0 0.0
    %289 = vmatprep.subr.mxu0 0.0
    %290 = vmatpush2.msra.mxu0 0.0
    %291 = vmatprep.subr.mxu0 0.0
    %292 = vmatpush2.msra.mxu0 0.0
    %293 = vmatprep.subr.mxu0 0.0
    %294 = vmatpush2.msra.mxu0 0.0
    %295 = vmatprep.subr.mxu0 0.0
    %296 = vmatpush2.msra.mxu0 0.0
    %297 = vmatprep.mubr.f32.mxu0 0.0
    %298 = vmatmul.mubr.f32.gmra.mxu0 %v222
    %v299 = vpop.f32.mrf.mxu0
    %v300 = vadd.f32 0.0, %v299
    %v301 = vpop.f32.mrf.mxu0
    %302 = vmatprep.mubr.f32.mxu0 0.0
    %303 = vmatmul.mubr.f32.gmra.mxu0 %v225
    %v304 = vpop.f32.mrf.mxu0
    %v305 = vadd.f32 0.0, %v304
    %v306 = vpop.f32.mrf.mxu0
    %307 = vmatprep.mubr.f32.mxu0 0.0
    %308 = vmatmul.mubr.f32.gmra.mxu0 %v228
    %v309 = vpop.f32.mrf.mxu0
    %v310 = vadd.f32 0.0, %v309
    %v311 = vpop.f32.mrf.mxu0
    %312 = vmatprep.mubr.f32.mxu0 0.0
    %313 = vmatmul.mubr.f32.gmra.mxu0 %v231
    %v314 = vpop.f32.mrf.mxu0
    %v315 = vadd.f32 0.0, %v314
    %v316 = vpop.f32.mrf.mxu0
    %317 = vdwg.mxu0
    %319 = vrot.lane.b32.xlu0 %v209, 112
    %v320 = vpop.permute.xlu0 %319
    %322 = vrot.lane.b32.xlu0 %v214, 112
    %v323 = vpop.permute.xlu0 %322
    %326 = vrot.lane.b32.xlu0 %v300, 112
    %v327 = vpop.permute.xlu0 %326
    %328 = vrot.lane.b32.xlu0 %v305, 112
    %v329 = vpop.permute.xlu0 %328
    %332 = vrot.lane.b32.xlu0 %v310, 112
    %v333 = vpop.permute.xlu0 %332
    %334 = vrot.lane.b32.xlu0 %v315, 112
    %v335 = vpop.permute.xlu0 %334
    %vm336 = vcmask 130048
    %v337 = vsel %vm336, %v209, 0
    %v339 = vsel %vm336, %v300, 0
    %v341 = vsel %vm336, %v305, 0
    %343 = vmatprep.subr.mxu0 0.0
    %344 = vmatpush1.xpose.msra.mxu0 0.0
    %345 = vmatprep.subr.mxu0 0.0
    %346 = vmatpush1.xpose.msra.mxu0 0.0
    %347 = vmatprep.subr.mxu0 0.0
    %348 = vmatpush1.xpose.msra.mxu0 0.0
    %349 = vmatprep.subr.mxu0 0.0
    %350 = vmatpush1.xpose.msra.mxu0 0.0
    %351 = vmatprep.subr.mxu0 0.0
    %352 = vmatpush1.xpose.msra.mxu0 0.0
    %353 = vmatprep.subr.mxu0 0.0
    %354 = vmatpush1.xpose.msra.mxu0 0.0
    %355 = vmatprep.subr.mxu0 0.0
    %356 = vmatpush1.xpose.msra.mxu0 0.0
    %357 = vmatprep.subr.mxu0 0.0
    %358 = vmatpush1.xpose.msra.mxu0 0.0
    %359 = vmatprep.subr.mxu0 0.0
    %360 = vmatpush1.xpose.msra.mxu0 0.0
    %361 = vmatprep.subr.mxu0 0.0
    %362 = vmatpush1.xpose.msra.mxu0 0.0
    %363 = vmatprep.subr.mxu0 0.0
    %364 = vmatpush1.xpose.msra.mxu0 0.0
    %365 = vmatprep.subr.mxu0 0.0
    %366 = vmatpush1.xpose.msra.mxu0 0.0
    %367 = vmatprep.subr.mxu0 0.0
    %368 = vmatpush1.xpose.msra.mxu0 0.0
    %369 = vmatprep.subr.mxu0 0.0
    %370 = vmatpush1.xpose.msra.mxu0 0.0
    %371 = vmatprep.subr.mxu0 0.0
    %372 = vmatpush1.xpose.msra.mxu0 %v341
    %373 = vmatprep.subr.mxu0 0.0
    %374 = vmatpush1.xpose.msra.mxu0 %v339
    %375 = vmatprep.subr.mxu0 0.0
    %376 = vmatpush2.xpose.msra.mxu0 0.0
    %377 = vmatprep.subr.mxu0 0.0
    %378 = vmatpush2.xpose.msra.mxu0 0.0
    %379 = vmatprep.subr.mxu0 0.0
    %380 = vmatpush2.xpose.msra.mxu0 0.0
    %381 = vmatprep.subr.mxu0 0.0
    %382 = vmatpush2.xpose.msra.mxu0 0.0
    %383 = vmatprep.subr.mxu0 0.0
    %384 = vmatpush2.xpose.msra.mxu0 0.0
    %385 = vmatprep.subr.mxu0 0.0
    %386 = vmatpush2.xpose.msra.mxu0 0.0
    %387 = vmatprep.subr.mxu0 0.0
    %388 = vmatpush2.xpose.msra.mxu0 0.0
    %389 = vmatprep.subr.mxu0 0.0
    %390 = vmatpush2.xpose.msra.mxu0 0.0
    %391 = vmatprep.subr.mxu0 0.0
    %392 = vmatpush2.xpose.msra.mxu0 0.0
    %393 = vmatprep.subr.mxu0 0.0
    %394 = vmatpush2.xpose.msra.mxu0 0.0
    %395 = vmatprep.subr.mxu0 0.0
    %396 = vmatpush2.xpose.msra.mxu0 0.0
    %397 = vmatprep.subr.mxu0 0.0
    %398 = vmatpush2.xpose.msra.mxu0 0.0
    %399 = vmatprep.subr.mxu0 0.0
    %400 = vmatpush2.xpose.msra.mxu0 0.0
    %401 = vmatprep.subr.mxu0 0.0
    %402 = vmatpush2.xpose.msra.mxu0 0.0
    %403 = vmatprep.subr.mxu0 0.0
    %404 = vmatpush2.xpose.msra.mxu0 0.0
    %405 = vmatprep.subr.mxu0 0.0
    %406 = vmatpush2.xpose.msra.mxu0 0.0
    %407 = vmatprep.mubr.f32.mxu0 0.0
    %408 = vmatmul.mubr.f32.gmra.mxu0 %v337
    %v409 = vpop.f32.mrf.mxu0
    %v410 = vadd.f32 0.0, %v409
    %v411 = vpop.f32.mrf.mxu0
    %412 = vdwg.mxu0
    %v413 = vsel %vm336, %v320, 0
    %v415 = vsel %vm336, %v327, 0
    %v417 = vsel %vm336, %v329, 0
    %419 = vmatprep.subr.mxu0 0.0
    %420 = vmatpush1.xpose.msra.mxu0 0.0
    %421 = vmatprep.subr.mxu0 0.0
    %422 = vmatpush1.xpose.msra.mxu0 0.0
    %423 = vmatprep.subr.mxu0 0.0
    %424 = vmatpush1.xpose.msra.mxu0 0.0
    %425 = vmatprep.subr.mxu0 0.0
    %426 = vmatpush1.xpose.msra.mxu0 0.0
    %427 = vmatprep.subr.mxu0 0.0
    %428 = vmatpush1.xpose.msra.mxu0 0.0
    %429 = vmatprep.subr.mxu0 0.0
    %430 = vmatpush1.xpose.msra.mxu0 0.0
    %431 = vmatprep.subr.mxu0 0.0
    %432 = vmatpush1.xpose.msra.mxu0 0.0
    %433 = vmatprep.subr.mxu0 0.0
    %434 = vmatpush1.xpose.msra.mxu0 0.0
    %435 = vmatprep.subr.mxu0 0.0
    %436 = vmatpush1.xpose.msra.mxu0 0.0
    %437 = vmatprep.subr.mxu0 0.0
    %438 = vmatpush1.xpose.msra.mxu0 0.0
    %439 = vmatprep.subr.mxu0 0.0
    %440 = vmatpush1.xpose.msra.mxu0 0.0
    %441 = vmatprep.subr.mxu0 0.0
    %442 = vmatpush1.xpose.msra.mxu0 0.0
    %443 = vmatprep.subr.mxu0 0.0
    %444 = vmatpush1.xpose.msra.mxu0 0.0
    %445 = vmatprep.subr.mxu0 0.0
    %446 = vmatpush1.xpose.msra.mxu0 0.0
    %447 = vmatprep.subr.mxu0 0.0
    %448 = vmatpush1.xpose.msra.mxu0 %v417
    %449 = vmatprep.subr.mxu0 0.0
    %450 = vmatpush1.xpose.msra.mxu0 %v415
    %451 = vmatprep.subr.mxu0 0.0
    %452 = vmatpush2.xpose.msra.mxu0 0.0
    %453 = vmatprep.subr.mxu0 0.0
    %454 = vmatpush2.xpose.msra.mxu0 0.0
    %455 = vmatprep.subr.mxu0 0.0
    %456 = vmatpush2.xpose.msra.mxu0 0.0
    %457 = vmatprep.subr.mxu0 0.0
    %458 = vmatpush2.xpose.msra.mxu0 0.0
    %459 = vmatprep.subr.mxu0 0.0
    %460 = vmatpush2.xpose.msra.mxu0 0.0
    %461 = vmatprep.subr.mxu0 0.0
    %462 = vmatpush2.xpose.msra.mxu0 0.0
    %463 = vmatprep.subr.mxu0 0.0
    %464 = vmatpush2.xpose.msra.mxu0 0.0
    %465 = vmatprep.subr.mxu0 0.0
    %466 = vmatpush2.xpose.msra.mxu0 0.0
    %467 = vmatprep.subr.mxu0 0.0
    %468 = vmatpush2.xpose.msra.mxu0 0.0
    %469 = vmatprep.subr.mxu0 0.0
    %470 = vmatpush2.xpose.msra.mxu0 0.0
    %471 = vmatprep.subr.mxu0 0.0
    %472 = vmatpush2.xpose.msra.mxu0 0.0
    %473 = vmatprep.subr.mxu0 0.0
    %474 = vmatpush2.xpose.msra.mxu0 0.0
    %475 = vmatprep.subr.mxu0 0.0
    %476 = vmatpush2.xpose.msra.mxu0 0.0
    %477 = vmatprep.subr.mxu0 0.0
    %478 = vmatpush2.xpose.msra.mxu0 0.0
    %479 = vmatprep.subr.mxu0 0.0
    %480 = vmatpush2.xpose.msra.mxu0 0.0
    %481 = vmatprep.subr.mxu0 0.0
    %482 = vmatpush2.xpose.msra.mxu0 0.0
    %483 = vmatprep.mubr.f32.mxu0 0.0
    %484 = vmatmul.mubr.f32.gmra.mxu0 %v413
    %v485 = vpop.f32.mrf.mxu0
    %v486 = vadd.f32 0.0, %v485
    %v487 = vpop.f32.mrf.mxu0
    %488 = vdwg.mxu0
    %v489 = vsel %vm336, %v214, 0
    %v491 = vsel %vm336, %v310, 0
    %v493 = vsel %vm336, %v315, 0
    %495 = vmatprep.subr.mxu0 0.0
    %496 = vmatpush1.xpose.msra.mxu0 0.0
    %497 = vmatprep.subr.mxu0 0.0
    %498 = vmatpush1.xpose.msra.mxu0 0.0
    %499 = vmatprep.subr.mxu0 0.0
    %500 = vmatpush1.xpose.msra.mxu0 0.0
    %501 = vmatprep.subr.mxu0 0.0
    %502 = vmatpush1.xpose.msra.mxu0 0.0
    %503 = vmatprep.subr.mxu0 0.0
    %504 = vmatpush1.xpose.msra.mxu0 0.0
    %505 = vmatprep.subr.mxu0 0.0
    %506 = vmatpush1.xpose.msra.mxu0 0.0
    %507 = vmatprep.subr.mxu0 0.0
    %508 = vmatpush1.xpose.msra.mxu0 0.0
    %509 = vmatprep.subr.mxu0 0.0
    %510 = vmatpush1.xpose.msra.mxu0 0.0
    %511 = vmatprep.subr.mxu0 0.0
    %512 = vmatpush1.xpose.msra.mxu0 0.0
    %513 = vmatprep.subr.mxu0 0.0
    %514 = vmatpush1.xpose.msra.mxu0 0.0
    %515 = vmatprep.subr.mxu0 0.0
    %516 = vmatpush1.xpose.msra.mxu0 0.0
    %517 = vmatprep.subr.mxu0 0.0
    %518 = vmatpush1.xpose.msra.mxu0 0.0
    %519 = vmatprep.subr.mxu0 0.0
    %520 = vmatpush1.xpose.msra.mxu0 0.0
    %521 = vmatprep.subr.mxu0 0.0
    %522 = vmatpush1.xpose.msra.mxu0 0.0
    %523 = vmatprep.subr.mxu0 0.0
    %524 = vmatpush1.xpose.msra.mxu0 %v493
    %525 = vmatprep.subr.mxu0 0.0
    %526 = vmatpush1.xpose.msra.mxu0 %v491
    %527 = vmatprep.subr.mxu0 0.0
    %528 = vmatpush2.xpose.msra.mxu0 0.0
    %529 = vmatprep.subr.mxu0 0.0
    %530 = vmatpush2.xpose.msra.mxu0 0.0
    %531 = vmatprep.subr.mxu0 0.0
    %532 = vmatpush2.xpose.msra.mxu0 0.0
    %533 = vmatprep.subr.mxu0 0.0
    %534 = vmatpush2.xpose.msra.mxu0 0.0
    %535 = vmatprep.subr.mxu0 0.0
    %536 = vmatpush2.xpose.msra.mxu0 0.0
    %537 = vmatprep.subr.mxu0 0.0
    %538 = vmatpush2.xpose.msra.mxu0 0.0
    %539 = vmatprep.subr.mxu0 0.0
    %540 = vmatpush2.xpose.msra.mxu0 0.0
    %541 = vmatprep.subr.mxu0 0.0
    %542 = vmatpush2.xpose.msra.mxu0 0.0
    %543 = vmatprep.subr.mxu0 0.0
    %544 = vmatpush2.xpose.msra.mxu0 0.0
    %545 = vmatprep.subr.mxu0 0.0
    %546 = vmatpush2.xpose.msra.mxu0 0.0
    %547 = vmatprep.subr.mxu0 0.0
    %548 = vmatpush2.xpose.msra.mxu0 0.0
    %549 = vmatprep.subr.mxu0 0.0
    %550 = vmatpush2.xpose.msra.mxu0 0.0
    %551 = vmatprep.subr.mxu0 0.0
    %552 = vmatpush2.xpose.msra.mxu0 0.0
    %553 = vmatprep.subr.mxu0 0.0
    %554 = vmatpush2.xpose.msra.mxu0 0.0
    %555 = vmatprep.subr.mxu0 0.0
    %556 = vmatpush2.xpose.msra.mxu0 0.0
    %557 = vmatprep.subr.mxu0 0.0
    %558 = vmatpush2.xpose.msra.mxu0 0.0
    %559 = vmatprep.mubr.f32.mxu0 0.0
    %560 = vmatmul.mubr.f32.gmra.mxu0 %v489
    %v561 = vpop.f32.mrf.mxu0
    %v562 = vadd.f32 0.0, %v561
    %v563 = vpop.f32.mrf.mxu0
    %564 = vdwg.mxu0
    %v565 = vsel %vm336, %v323, 0
    %v567 = vsel %vm336, %v333, 0
    %v569 = vsel %vm336, %v335, 0
    %571 = vmatprep.subr.mxu0 0.0
    %572 = vmatpush1.xpose.msra.mxu0 0.0
    %573 = vmatprep.subr.mxu0 0.0
    %574 = vmatpush1.xpose.msra.mxu0 0.0
    %575 = vmatprep.subr.mxu0 0.0
    %576 = vmatpush1.xpose.msra.mxu0 0.0
    %577 = vmatprep.subr.mxu0 0.0
    %578 = vmatpush1.xpose.msra.mxu0 0.0
    %579 = vmatprep.subr.mxu0 0.0
    %580 = vmatpush1.xpose.msra.mxu0 0.0
    %581 = vmatprep.subr.mxu0 0.0
    %582 = vmatpush1.xpose.msra.mxu0 0.0
    %583 = vmatprep.subr.mxu0 0.0
    %584 = vmatpush1.xpose.msra.mxu0 0.0
    %585 = vmatprep.subr.mxu0 0.0
    %586 = vmatpush1.xpose.msra.mxu0 0.0
    %587 = vmatprep.subr.mxu0 0.0
    %588 = vmatpush1.xpose.msra.mxu0 0.0
    %589 = vmatprep.subr.mxu0 0.0
    %590 = vmatpush1.xpose.msra.mxu0 0.0
    %591 = vmatprep.subr.mxu0 0.0
    %592 = vmatpush1.xpose.msra.mxu0 0.0
    %593 = vmatprep.subr.mxu0 0.0
    %594 = vmatpush1.xpose.msra.mxu0 0.0
    %595 = vmatprep.subr.mxu0 0.0
    %596 = vmatpush1.xpose.msra.mxu0 0.0
    %597 = vmatprep.subr.mxu0 0.0
    %598 = vmatpush1.xpose.msra.mxu0 0.0
    %599 = vmatprep.subr.mxu0 0.0
    %600 = vmatpush1.xpose.msra.mxu0 %v569
    %601 = vmatprep.subr.mxu0 0.0
    %602 = vmatpush1.xpose.msra.mxu0 %v567
    %603 = vmatprep.subr.mxu0 0.0
    %604 = vmatpush2.xpose.msra.mxu0 0.0
    %605 = vmatprep.subr.mxu0 0.0
    %606 = vmatpush2.xpose.msra.mxu0 0.0
    %607 = vmatprep.subr.mxu0 0.0
    %608 = vmatpush2.xpose.msra.mxu0 0.0
    %609 = vmatprep.subr.mxu0 0.0
    %610 = vmatpush2.xpose.msra.mxu0 0.0
    %611 = vmatprep.subr.mxu0 0.0
    %612 = vmatpush2.xpose.msra.mxu0 0.0
    %613 = vmatprep.subr.mxu0 0.0
    %614 = vmatpush2.xpose.msra.mxu0 0.0
    %615 = vmatprep.subr.mxu0 0.0
    %616 = vmatpush2.xpose.msra.mxu0 0.0
    %617 = vmatprep.subr.mxu0 0.0
    %618 = vmatpush2.xpose.msra.mxu0 0.0
    %619 = vmatprep.subr.mxu0 0.0
    %620 = vmatpush2.xpose.msra.mxu0 0.0
    %621 = vmatprep.subr.mxu0 0.0
    %622 = vmatpush2.xpose.msra.mxu0 0.0
    %623 = vmatprep.subr.mxu0 0.0
    %624 = vmatpush2.xpose.msra.mxu0 0.0
    %625 = vmatprep.subr.mxu0 0.0
    %626 = vmatpush2.xpose.msra.mxu0 0.0
    %627 = vmatprep.subr.mxu0 0.0
    %628 = vmatpush2.xpose.msra.mxu0 0.0
    %629 = vmatprep.subr.mxu0 0.0
    %630 = vmatpush2.xpose.msra.mxu0 0.0
    %631 = vmatprep.subr.mxu0 0.0
    %632 = vmatpush2.xpose.msra.mxu0 0.0
    %633 = vmatprep.subr.mxu0 0.0
    %634 = vmatpush2.xpose.msra.mxu0 0.0
    %635 = vmatprep.mubr.f32.mxu0 0.0
    %636 = vmatmul.mubr.f32.gmra.mxu0 %v565
    %v637 = vpop.f32.mrf.mxu0
    %v638 = vadd.f32 0.0, %v637
    %v639 = vpop.f32.mrf.mxu0
    %640 = vdwg.mxu0
    %v641 = vsel %vm336, %v410, -inf
    %642 = vmax.xlane.f32.xlu0 %v641
    %v643 = vpop.xlane.xlu0 %642
    %v644 = vsel %vm336, %v486, -inf
    %645 = vmax.xlane.f32.xlu0 %v644
    %v646 = vpop.xlane.xlu0 %645
    %v647 = vsel %vm336, %v562, -inf
    %648 = vmax.xlane.f32.xlu0 %v647
    %v649 = vpop.xlane.xlu0 %648
    %v650 = vsel %vm336, %v638, -inf
    %651 = vmax.xlane.f32.xlu0 %v650
    %v652 = vpop.xlane.xlu0 %651
    %v653 = vsub.f32 %v410, %v643
    %v654 = vsub.f32 %v486, %v646
    %v655 = vsub.f32 %v562, %v649
    %v656 = vsub.f32 %v638, %v652
    %v657 = vmul.f32 %v653, 1.442695
    %v658 = vpow.pop %v657
    %v659 = vmul.f32 %v654, 1.442695
    %v660 = vpow.pop %v659
    %v661 = vmul.f32 %v655, 1.442695
    %v662 = vpow.pop %v661
    %v663 = vmul.f32 %v656, 1.442695
    %v664 = vpow.pop %v663
    %v665 = vsel %vm336, %v658, 0.0
    %666 = vadd.xlane.f32.xlu0 %v665
    %v667 = vpop.xlane.xlu0 %666
    %v668 = vsel %vm336, %v660, 0.0
    %669 = vadd.xlane.f32.xlu0 %v668
    %v670 = vpop.xlane.xlu0 %669
    %v671 = vsel %vm336, %v662, 0.0
    %672 = vadd.xlane.f32.xlu0 %v671
    %v673 = vpop.xlane.xlu0 %672
    %v674 = vsel %vm336, %v664, 0.0
    %675 = vadd.xlane.f32.xlu0 %v674
    %v676 = vpop.xlane.xlu0 %675
    %v677 = vrcp.pop %v667
    %v678 = vrcp.pop %v670
    %v679 = vrcp.pop %v673
    %v680 = vrcp.pop %v676
    %v681 = vmul.f32 %v658, %v677
    %v682 = vmul.f32 %v660, %v678
    %v683 = vmul.f32 %v662, %v679
    %v684 = vmul.f32 %v664, %v680
    %685 = vrot.lane.b32.xlu0 %v300, 96
    %v686 = vpop.permute.xlu0 %685
    %687 = vrot.lane.b32.xlu0 %v305, 96
    %v688 = vpop.permute.xlu0 %687
    %v692 = vsel %vm336, %v681, 0
    %694 = vmatprep.subr.mxu0 0.0
    %695 = vmatpush1.msra.mxu0 0.0
    %696 = vmatprep.subr.mxu0 0.0
    %697 = vmatpush1.msra.mxu0 0.0
    %698 = vmatprep.subr.mxu0 0.0
    %699 = vmatpush1.msra.mxu0 0.0
    %700 = vmatprep.subr.mxu0 0.0
    %701 = vmatpush1.msra.mxu0 0.0
    %702 = vmatprep.subr.mxu0 0.0
    %703 = vmatpush1.msra.mxu0 0.0
    %704 = vmatprep.subr.mxu0 0.0
    %705 = vmatpush1.msra.mxu0 0.0
    %706 = vmatprep.subr.mxu0 0.0
    %707 = vmatpush1.msra.mxu0 0.0
    %708 = vmatprep.subr.mxu0 0.0
    %709 = vmatpush1.msra.mxu0 0.0
    %710 = vmatprep.subr.mxu0 0.0
    %711 = vmatpush1.msra.mxu0 0.0
    %712 = vmatprep.subr.mxu0 0.0
    %713 = vmatpush1.msra.mxu0 0.0
    %714 = vmatprep.subr.mxu0 0.0
    %715 = vmatpush1.msra.mxu0 0.0
    %716 = vmatprep.subr.mxu0 0.0
    %717 = vmatpush1.msra.mxu0 0.0
    %718 = vmatprep.subr.mxu0 0.0
    %719 = vmatpush1.msra.mxu0 0.0
    %720 = vmatprep.subr.mxu0 0.0
    %721 = vmatpush1.msra.mxu0 0.0
    %722 = vmatprep.subr.mxu0 0.0
    %723 = vmatpush1.msra.mxu0 %v688
    %724 = vmatprep.subr.mxu0 0.0
    %725 = vmatpush1.msra.mxu0 %v686
    %726 = vmatprep.subr.mxu0 0.0
    %727 = vmatpush2.msra.mxu0 0.0
    %728 = vmatprep.subr.mxu0 0.0
    %729 = vmatpush2.msra.mxu0 0.0
    %730 = vmatprep.subr.mxu0 0.0
    %731 = vmatpush2.msra.mxu0 0.0
    %732 = vmatprep.subr.mxu0 0.0
    %733 = vmatpush2.msra.mxu0 0.0
    %734 = vmatprep.subr.mxu0 0.0
    %735 = vmatpush2.msra.mxu0 0.0
    %736 = vmatprep.subr.mxu0 0.0
    %737 = vmatpush2.msra.mxu0 0.0
    %738 = vmatprep.subr.mxu0 0.0
    %739 = vmatpush2.msra.mxu0 0.0
    %740 = vmatprep.subr.mxu0 0.0
    %741 = vmatpush2.msra.mxu0 0.0
    %742 = vmatprep.subr.mxu0 0.0
    %743 = vmatpush2.msra.mxu0 0.0
    %744 = vmatprep.subr.mxu0 0.0
    %745 = vmatpush2.msra.mxu0 0.0
    %746 = vmatprep.subr.mxu0 0.0
    %747 = vmatpush2.msra.mxu0 0.0
    %748 = vmatprep.subr.mxu0 0.0
    %749 = vmatpush2.msra.mxu0 0.0
    %750 = vmatprep.subr.mxu0 0.0
    %751 = vmatpush2.msra.mxu0 0.0
    %752 = vmatprep.subr.mxu0 0.0
    %753 = vmatpush2.msra.mxu0 0.0
    %754 = vmatprep.subr.mxu0 0.0
    %755 = vmatpush2.msra.mxu0 0.0
    %756 = vmatprep.subr.mxu0 0.0
    %757 = vmatpush2.msra.mxu0 0.0
    %758 = vmatprep.mubr.f32.mxu0 0.0
    %759 = vmatmul.mubr.f32.gmra.mxu0 %v692
    %v760 = vpop.f32.mrf.mxu0
    %v761 = vadd.f32 0.0, %v760
    %v762 = vpop.f32.mrf.mxu0
    %763 = vdwg.mxu0
    %764 = vrot.lane.b32.xlu0 %v327, 96
    %v765 = vpop.permute.xlu0 %764
    %766 = vrot.lane.b32.xlu0 %v329, 96
    %v767 = vpop.permute.xlu0 %766
    %v771 = vsel %vm336, %v682, 0
    %773 = vmatprep.subr.mxu0 0.0
    %774 = vmatpush1.msra.mxu0 0.0
    %775 = vmatprep.subr.mxu0 0.0
    %776 = vmatpush1.msra.mxu0 0.0
    %777 = vmatprep.subr.mxu0 0.0
    %778 = vmatpush1.msra.mxu0 0.0
    %779 = vmatprep.subr.mxu0 0.0
    %780 = vmatpush1.msra.mxu0 0.0
    %781 = vmatprep.subr.mxu0 0.0
    %782 = vmatpush1.msra.mxu0 0.0
    %783 = vmatprep.subr.mxu0 0.0
    %784 = vmatpush1.msra.mxu0 0.0
    %785 = vmatprep.subr.mxu0 0.0
    %786 = vmatpush1.msra.mxu0 0.0
    %787 = vmatprep.subr.mxu0 0.0
    %788 = vmatpush1.msra.mxu0 0.0
    %789 = vmatprep.subr.mxu0 0.0
    %790 = vmatpush1.msra.mxu0 0.0
    %791 = vmatprep.subr.mxu0 0.0
    %792 = vmatpush1.msra.mxu0 0.0
    %793 = vmatprep.subr.mxu0 0.0
    %794 = vmatpush1.msra.mxu0 0.0
    %795 = vmatprep.subr.mxu0 0.0
    %796 = vmatpush1.msra.mxu0 0.0
    %797 = vmatprep.subr.mxu0 0.0
    %798 = vmatpush1.msra.mxu0 0.0
    %799 = vmatprep.subr.mxu0 0.0
    %800 = vmatpush1.msra.mxu0 0.0
    %801 = vmatprep.subr.mxu0 0.0
    %802 = vmatpush1.msra.mxu0 %v767
    %803 = vmatprep.subr.mxu0 0.0
    %804 = vmatpush1.msra.mxu0 %v765
    %805 = vmatprep.subr.mxu0 0.0
    %806 = vmatpush2.msra.mxu0 0.0
    %807 = vmatprep.subr.mxu0 0.0
    %808 = vmatpush2.msra.mxu0 0.0
    %809 = vmatprep.subr.mxu0 0.0
    %810 = vmatpush2.msra.mxu0 0.0
    %811 = vmatprep.subr.mxu0 0.0
    %812 = vmatpush2.msra.mxu0 0.0
    %813 = vmatprep.subr.mxu0 0.0
    %814 = vmatpush2.msra.mxu0 0.0
    %815 = vmatprep.subr.mxu0 0.0
    %816 = vmatpush2.msra.mxu0 0.0
    %817 = vmatprep.subr.mxu0 0.0
    %818 = vmatpush2.msra.mxu0 0.0
    %819 = vmatprep.subr.mxu0 0.0
    %820 = vmatpush2.msra.mxu0 0.0
    %821 = vmatprep.subr.mxu0 0.0
    %822 = vmatpush2.msra.mxu0 0.0
    %823 = vmatprep.subr.mxu0 0.0
    %824 = vmatpush2.msra.mxu0 0.0
    %825 = vmatprep.subr.mxu0 0.0
    %826 = vmatpush2.msra.mxu0 0.0
    %827 = vmatprep.subr.mxu0 0.0
    %828 = vmatpush2.msra.mxu0 0.0
    %829 = vmatprep.subr.mxu0 0.0
    %830 = vmatpush2.msra.mxu0 0.0
    %831 = vmatprep.subr.mxu0 0.0
    %832 = vmatpush2.msra.mxu0 0.0
    %833 = vmatprep.subr.mxu0 0.0
    %834 = vmatpush2.msra.mxu0 0.0
    %835 = vmatprep.subr.mxu0 0.0
    %836 = vmatpush2.msra.mxu0 0.0
    %837 = vmatprep.mubr.f32.mxu0 0.0
    %838 = vmatmul.mubr.f32.gmra.mxu0 %v771
    %v839 = vpop.f32.mrf.mxu0
    %v840 = vadd.f32 0.0, %v839
    %v841 = vpop.f32.mrf.mxu0
    %842 = vdwg.mxu0
    %843 = vrot.lane.b32.xlu0 %v310, 96
    %v844 = vpop.permute.xlu0 %843
    %845 = vrot.lane.b32.xlu0 %v315, 96
    %v846 = vpop.permute.xlu0 %845
    %v850 = vsel %vm336, %v683, 0
    %852 = vmatprep.subr.mxu0 0.0
    %853 = vmatpush1.msra.mxu0 0.0
    %854 = vmatprep.subr.mxu0 0.0
    %855 = vmatpush1.msra.mxu0 0.0
    %856 = vmatprep.subr.mxu0 0.0
    %857 = vmatpush1.msra.mxu0 0.0
    %858 = vmatprep.subr.mxu0 0.0
    %859 = vmatpush1.msra.mxu0 0.0
    %860 = vmatprep.subr.mxu0 0.0
    %861 = vmatpush1.msra.mxu0 0.0
    %862 = vmatprep.subr.mxu0 0.0
    %863 = vmatpush1.msra.mxu0 0.0
    %864 = vmatprep.subr.mxu0 0.0
    %865 = vmatpush1.msra.mxu0 0.0
    %866 = vmatprep.subr.mxu0 0.0
    %867 = vmatpush1.msra.mxu0 0.0
    %868 = vmatprep.subr.mxu0 0.0
    %869 = vmatpush1.msra.mxu0 0.0
    %870 = vmatprep.subr.mxu0 0.0
    %871 = vmatpush1.msra.mxu0 0.0
    %872 = vmatprep.subr.mxu0 0.0
    %873 = vmatpush1.msra.mxu0 0.0
    %874 = vmatprep.subr.mxu0 0.0
    %875 = vmatpush1.msra.mxu0 0.0
    %876 = vmatprep.subr.mxu0 0.0
    %877 = vmatpush1.msra.mxu0 0.0
    %878 = vmatprep.subr.mxu0 0.0
    %879 = vmatpush1.msra.mxu0 0.0
    %880 = vmatprep.subr.mxu0 0.0
    %881 = vmatpush1.msra.mxu0 %v846
    %882 = vmatprep.subr.mxu0 0.0
    %883 = vmatpush1.msra.mxu0 %v844
    %884 = vmatprep.subr.mxu0 0.0
    %885 = vmatpush2.msra.mxu0 0.0
    %886 = vmatprep.subr.mxu0 0.0
    %887 = vmatpush2.msra.mxu0 0.0
    %888 = vmatprep.subr.mxu0 0.0
    %889 = vmatpush2.msra.mxu0 0.0
    %890 = vmatprep.subr.mxu0 0.0
    %891 = vmatpush2.msra.mxu0 0.0
    %892 = vmatprep.subr.mxu0 0.0
    %893 = vmatpush2.msra.mxu0 0.0
    %894 = vmatprep.subr.mxu0 0.0
    %895 = vmatpush2.msra.mxu0 0.0
    %896 = vmatprep.subr.mxu0 0.0
    %897 = vmatpush2.msra.mxu0 0.0
    %898 = vmatprep.subr.mxu0 0.0
    %899 = vmatpush2.msra.mxu0 0.0
    %900 = vmatprep.subr.mxu0 0.0
    %901 = vmatpush2.msra.mxu0 0.0
    %902 = vmatprep.subr.mxu0 0.0
    %903 = vmatpush2.msra.mxu0 0.0
    %904 = vmatprep.subr.mxu0 0.0
    %905 = vmatpush2.msra.mxu0 0.0
    %906 = vmatprep.subr.mxu0 0.0
    %907 = vmatpush2.msra.mxu0 0.0
    %908 = vmatprep.subr.mxu0 0.0
    %909 = vmatpush2.msra.mxu0 0.0
    %910 = vmatprep.subr.mxu0 0.0
    %911 = vmatpush2.msra.mxu0 0.0
    %912 = vmatprep.subr.mxu0 0.0
    %913 = vmatpush2.msra.mxu0 0.0
    %914 = vmatprep.subr.mxu0 0.0
    %915 = vmatpush2.msra.mxu0 0.0
    %916 = vmatprep.mubr.f32.mxu0 0.0
    %917 = vmatmul.mubr.f32.gmra.mxu0 %v850
    %v918 = vpop.f32.mrf.mxu0
    %v919 = vadd.f32 0.0, %v918
    %v920 = vpop.f32.mrf.mxu0
    %921 = vdwg.mxu0
    %922 = vrot.lane.b32.xlu0 %v333, 96
    %v923 = vpop.permute.xlu0 %922
    %924 = vrot.lane.b32.xlu0 %v335, 96
    %v925 = vpop.permute.xlu0 %924
    %v929 = vsel %vm336, %v684, 0
    %931 = vmatprep.subr.mxu0 0.0
    %932 = vmatpush1.msra.mxu0 0.0
    %933 = vmatprep.subr.mxu0 0.0
    %934 = vmatpush1.msra.mxu0 0.0
    %935 = vmatprep.subr.mxu0 0.0
    %936 = vmatpush1.msra.mxu0 0.0
    %937 = vmatprep.subr.mxu0 0.0
    %938 = vmatpush1.msra.mxu0 0.0
    %939 = vmatprep.subr.mxu0 0.0
    %940 = vmatpush1.msra.mxu0 0.0
    %941 = vmatprep.subr.mxu0 0.0
    %942 = vmatpush1.msra.mxu0 0.0
    %943 = vmatprep.subr.mxu0 0.0
    %944 = vmatpush1.msra.mxu0 0.0
    %945 = vmatprep.subr.mxu0 0.0
    %946 = vmatpush1.msra.mxu0 0.0
    %947 = vmatprep.subr.mxu0 0.0
    %948 = vmatpush1.msra.mxu0 0.0
    %949 = vmatprep.subr.mxu0 0.0
    %950 = vmatpush1.msra.mxu0 0.0
    %951 = vmatprep.subr.mxu0 0.0
    %952 = vmatpush1.msra.mxu0 0.0
    %953 = vmatprep.subr.mxu0 0.0
    %954 = vmatpush1.msra.mxu0 0.0
    %955 = vmatprep.subr.mxu0 0.0
    %956 = vmatpush1.msra.mxu0 0.0
    %957 = vmatprep.subr.mxu0 0.0
    %958 = vmatpush1.msra.mxu0 0.0
    %959 = vmatprep.subr.mxu0 0.0
    %960 = vmatpush1.msra.mxu0 %v925
    %961 = vmatprep.subr.mxu0 0.0
    %962 = vmatpush1.msra.mxu0 %v923
    %963 = vmatprep.subr.mxu0 0.0
    %964 = vmatpush2.msra.mxu0 0.0
    %965 = vmatprep.subr.mxu0 0.0
    %966 = vmatpush2.msra.mxu0 0.0
    %967 = vmatprep.subr.mxu0 0.0
    %968 = vmatpush2.msra.mxu0 0.0
    %969 = vmatprep.subr.mxu0 0.0
    %970 = vmatpush2.msra.mxu0 0.0
    %971 = vmatprep.subr.mxu0 0.0
    %972 = vmatpush2.msra.mxu0 0.0
    %973 = vmatprep.subr.mxu0 0.0
    %974 = vmatpush2.msra.mxu0 0.0
    %975 = vmatprep.subr.mxu0 0.0
    %976 = vmatpush2.msra.mxu0 0.0
    %977 = vmatprep.subr.mxu0 0.0
    %978 = vmatpush2.msra.mxu0 0.0
    %979 = vmatprep.subr.mxu0 0.0
    %980 = vmatpush2.msra.mxu0 0.0
    %981 = vmatprep.subr.mxu0 0.0
    %982 = vmatpush2.msra.mxu0 0.0
    %983 = vmatprep.subr.mxu0 0.0
    %984 = vmatpush2.msra.mxu0 0.0
    %985 = vmatprep.subr.mxu0 0.0
    %986 = vmatpush2.msra.mxu0 0.0
    %987 = vmatprep.subr.mxu0 0.0
    %988 = vmatpush2.msra.mxu0 0.0
    %989 = vmatprep.subr.mxu0 0.0
    %990 = vmatpush2.msra.mxu0 0.0
    %991 = vmatprep.subr.mxu0 0.0
    %992 = vmatpush2.msra.mxu0 0.0
    %993 = vmatprep.subr.mxu0 0.0
    %994 = vmatpush2.msra.mxu0 0.0
    %995 = vmatprep.mubr.f32.mxu0 0.0
    %996 = vmatmul.mubr.f32.gmra.mxu0 %v929
    %v997 = vpop.f32.mrf.mxu0
    %v998 = vadd.f32 0.0, %v997
    %v999 = vpop.f32.mrf.mxu0
    %1000 = vdwg.mxu0
    %1002 = vrot.lane.b32.xlu0 %v840, 16
    %v1003 = vpop.permute.xlu0 %1002
    %v1005 = vsel %vm336, %v761, %v1003
    %1007 = vrot.lane.b32.xlu0 %v998, 16
    %v1008 = vpop.permute.xlu0 %1007
    %v1010 = vsel %vm336, %v919, %v1008
    %v1011 = vld [vmem:[#allocation5] sm:$0xff]
    %v1012 = vld [vmem:[#allocation5 + $0x8] sm:$0xff]
    %v1013 = vld [vmem:[#allocation5 + $0x10] sm:$0xff]
    %v1014 = vld [vmem:[#allocation5 + $0x18] sm:$0xff]
    %v1016 = vsel %vm88, %v1005, 0
    %v1019 = vsel %vm88, %v1010, 0
    %1021 = vmatprep.subr.mxu0 0.0
    %1022 = vmatpush1.msra.mxu0 0.0
    %1023 = vmatprep.subr.mxu0 0.0
    %1024 = vmatpush1.msra.mxu0 0.0
    %1025 = vmatprep.subr.mxu0 0.0
    %1026 = vmatpush1.msra.mxu0 0.0
    %1027 = vmatprep.subr.mxu0 0.0
    %1028 = vmatpush1.msra.mxu0 0.0
    %1029 = vmatprep.subr.mxu0 0.0
    %1030 = vmatpush1.msra.mxu0 0.0
    %1031 = vmatprep.subr.mxu0 0.0
    %1032 = vmatpush1.msra.mxu0 0.0
    %1033 = vmatprep.subr.mxu0 0.0
    %1034 = vmatpush1.msra.mxu0 0.0
    %1035 = vmatprep.subr.mxu0 0.0
    %1036 = vmatpush1.msra.mxu0 0.0
    %1037 = vmatprep.subr.mxu0 0.0
    %1038 = vmatpush1.msra.mxu0 0.0
    %1039 = vmatprep.subr.mxu0 0.0
    %1040 = vmatpush1.msra.mxu0 0.0
    %1041 = vmatprep.subr.mxu0 0.0
    %1042 = vmatpush1.msra.mxu0 0.0
    %1043 = vmatprep.subr.mxu0 0.0
    %1044 = vmatpush1.msra.mxu0 0.0
    %1045 = vmatprep.subr.mxu0 0.0
    %1046 = vmatpush1.msra.mxu0 %v1014
    %1047 = vmatprep.subr.mxu0 0.0
    %1048 = vmatpush1.msra.mxu0 %v1013
    %1049 = vmatprep.subr.mxu0 0.0
    %1050 = vmatpush1.msra.mxu0 %v1012
    %1051 = vmatprep.subr.mxu0 0.0
    %1052 = vmatpush1.msra.mxu0 %v1011
    %1053 = vmatprep.subr.mxu0 0.0
    %1054 = vmatpush2.msra.mxu0 0.0
    %1055 = vmatprep.subr.mxu0 0.0
    %1056 = vmatpush2.msra.mxu0 0.0
    %1057 = vmatprep.subr.mxu0 0.0
    %1058 = vmatpush2.msra.mxu0 0.0
    %1059 = vmatprep.subr.mxu0 0.0
    %1060 = vmatpush2.msra.mxu0 0.0
    %1061 = vmatprep.subr.mxu0 0.0
    %1062 = vmatpush2.msra.mxu0 0.0
    %1063 = vmatprep.subr.mxu0 0.0
    %1064 = vmatpush2.msra.mxu0 0.0
    %1065 = vmatprep.subr.mxu0 0.0
    %1066 = vmatpush2.msra.mxu0 0.0
    %1067 = vmatprep.subr.mxu0 0.0
    %1068 = vmatpush2.msra.mxu0 0.0
    %1069 = vmatprep.subr.mxu0 0.0
    %1070 = vmatpush2.msra.mxu0 0.0
    %1071 = vmatprep.subr.mxu0 0.0
    %1072 = vmatpush2.msra.mxu0 0.0
    %1073 = vmatprep.subr.mxu0 0.0
    %1074 = vmatpush2.msra.mxu0 0.0
    %1075 = vmatprep.subr.mxu0 0.0
    %1076 = vmatpush2.msra.mxu0 0.0
    %1077 = vmatprep.subr.mxu0 0.0
    %1078 = vmatpush2.msra.mxu0 0.0
    %1079 = vmatprep.subr.mxu0 0.0
    %1080 = vmatpush2.msra.mxu0 0.0
    %1081 = vmatprep.subr.mxu0 0.0
    %1082 = vmatpush2.msra.mxu0 0.0
    %1083 = vmatprep.subr.mxu0 0.0
    %1084 = vmatpush2.msra.mxu0 0.0
    %1085 = vmatprep.mubr.f32.mxu0 0.0
    %1086 = vmatmul.mubr.f32.gmra.mxu0 %v1016
    %v1087 = vpop.f32.mrf.mxu0
    %v1088 = vadd.f32 0.0, %v1087
    %v1089 = vpop.f32.mrf.mxu0
    %1090 = vmatprep.mubr.f32.mxu0 0.0
    %1091 = vmatmul.mubr.f32.gmra.mxu0 %v1019
    %v1092 = vpop.f32.mrf.mxu0
    %v1093 = vadd.f32 0.0, %v1092
    %v1094 = vpop.f32.mrf.mxu0
    %1095 = vdwg.mxu0
    %v1096 = vadd.f32 %v80, %v1088
    %v1097 = vadd.f32 %v81, %v1093
    %v1098 = vld [vmem:[%s4] sm:$0x1]
    %v1099 = vld [vmem:[%s5] sm:$0x1]
    %v1100 = vsel %vm88, %v1096, 0.0
    %1101 = vadd.xlane.f32.xlu0 %v1100
    %v1102 = vpop.xlane.xlu0 %1101
    %v1103 = vsel %vm88, %v1097, 0.0
    %1104 = vadd.xlane.f32.xlu0 %v1103
    %v1105 = vpop.xlane.xlu0 %1104
    %v1106 = vmul.f32 %v1102, %v95
    %v1107 = vmul.f32 %v1105, %v95
    %v1108 = vsub.f32 %v1096, %v1106
    %v1109 = vsub.f32 %v1097, %v1107
    %v1110 = vmul.f32 %v1108, %v1108
    %v1111 = vmul.f32 %v1109, %v1109
    %v1112 = vsel %vm88, %v1110, 0.0
    %1113 = vadd.xlane.f32.xlu0 %v1112
    %v1114 = vpop.xlane.xlu0 %1113
    %v1115 = vsel %vm88, %v1111, 0.0
    %1116 = vadd.xlane.f32.xlu0 %v1115
    %v1117 = vpop.xlane.xlu0 %1116
    %v1118 = vmul.f32 %v1114, %v95
    %v1119 = vmul.f32 %v1117, %v95
    %v1120 = vadd.f32 %v1118, 1e-05
    %v1121 = vadd.f32 %v1119, 1e-05
    %v1122 = vrsqrt.pop %v1120
    %v1123 = vrsqrt.pop %v1121
    %v1124 = vmul.f32 %v1108, %v1122
    %v1125 = vmul.f32 %v1109, %v1123
    %v1127 = vlaneseq
    %v1128 = vshrl.u32 %v1127, 7
    %v1129 = vsub.s32 0, %v1128
    %v1130 = vrot.slane %v1098, %v1129
    %v1132 = vmul.f32 %v1124, %v1130
    %v1133 = vmul.f32 %v1125, %v1130
    %v1135 = vlaneseq
    %v1136 = vshrl.u32 %v1135, 7
    %v1137 = vsub.s32 0, %v1136
    %v1138 = vrot.slane %v1099, %v1137
    %v1140 = vadd.f32 %v1132, %v1138
    %v1141 = vadd.f32 %v1133, %v1138
    %v1142 = vld [vmem:[#allocation7] sm:$0xff]
    %v1143 = vld [vmem:[#allocation7 + $0x8] sm:$0xff]
    %v1144 = vld [vmem:[#allocation7 + $0x10] sm:$0xff]
    %v1145 = vld [vmem:[#allocation7 + $0x18] sm:$0xff]
    %v1147 = vsel %vm88, %v1140, 0
    %v1150 = vsel %vm88, %v1141, 0
    %1152 = vmatprep.subr.mxu0 0.0
    %1153 = vmatpush1.msra.mxu0 0.0
    %1154 = vmatprep.subr.mxu0 0.0
    %1155 = vmatpush1.msra.mxu0 0.0
    %1156 = vmatprep.subr.mxu0 0.0
    %1157 = vmatpush1.msra.mxu0 0.0
    %1158 = vmatprep.subr.mxu0 0.0
    %1159 = vmatpush1.msra.mxu0 0.0
    %1160 = vmatprep.subr.mxu0 0.0
    %1161 = vmatpush1.msra.mxu0 0.0
    %1162 = vmatprep.subr.mxu0 0.0
    %1163 = vmatpush1.msra.mxu0 0.0
    %1164 = vmatprep.subr.mxu0 0.0
    %1165 = vmatpush1.msra.mxu0 0.0
    %1166 = vmatprep.subr.mxu0 0.0
    %1167 = vmatpush1.msra.mxu0 0.0
    %1168 = vmatprep.subr.mxu0 0.0
    %1169 = vmatpush1.msra.mxu0 0.0
    %1170 = vmatprep.subr.mxu0 0.0
    %1171 = vmatpush1.msra.mxu0 0.0
    %1172 = vmatprep.subr.mxu0 0.0
    %1173 = vmatpush1.msra.mxu0 0.0
    %1174 = vmatprep.subr.mxu0 0.0
    %1175 = vmatpush1.msra.mxu0 0.0
    %1176 = vmatprep.subr.mxu0 0.0
    %1177 = vmatpush1.msra.mxu0 %v1145
    %1178 = vmatprep.subr.mxu0 0.0
    %1179 = vmatpush1.msra.mxu0 %v1144
    %1180 = vmatprep.subr.mxu0 0.0
    %1181 = vmatpush1.msra.mxu0 %v1143
    %1182 = vmatprep.subr.mxu0 0.0
    %1183 = vmatpush1.msra.mxu0 %v1142
    %1184 = vmatprep.subr.mxu0 0.0
    %1185 = vmatpush2.msra.mxu0 0.0
    %1186 = vmatprep.subr.mxu0 0.0
    %1187 = vmatpush2.msra.mxu0 0.0
    %1188 = vmatprep.subr.mxu0 0.0
    %1189 = vmatpush2.msra.mxu0 0.0
    %1190 = vmatprep.subr.mxu0 0.0
    %1191 = vmatpush2.msra.mxu0 0.0
    %1192 = vmatprep.subr.mxu0 0.0
    %1193 = vmatpush2.msra.mxu0 0.0
    %1194 = vmatprep.subr.mxu0 0.0
    %1195 = vmatpush2.msra.mxu0 0.0
    %1196 = vmatprep.subr.mxu0 0.0
    %1197 = vmatpush2.msra.mxu0 0.0
    %1198 = vmatprep.subr.mxu0 0.0
    %1199 = vmatpush2.msra.mxu0 0.0
    %1200 = vmatprep.subr.mxu0 0.0
    %1201 = vmatpush2.msra.mxu0 0.0
    %1202 = vmatprep.subr.mxu0 0.0
    %1203 = vmatpush2.msra.mxu0 0.0
    %1204 = vmatprep.subr.mxu0 0.0
    %1205 = vmatpush2.msra.mxu0 0.0
    %1206 = vmatprep.subr.mxu0 0.0
    %1207 = vmatpush2.msra.mxu0 0.0
    %1208 = vmatprep.subr.mxu0 0.0
    %1209 = vmatpush2.msra.mxu0 0.0
    %1210 = vmatprep.subr.mxu0 0.0
    %1211 = vmatpush2.msra.mxu0 0.0
    %1212 = vmatprep.subr.mxu0 0.0
    %1213 = vmatpush2.msra.mxu0 0.0
    %1214 = vmatprep.subr.mxu0 0.0
    %1215 = vmatpush2.msra.mxu0 0.0
    %1216 = vmatprep.mubr.f32.mxu0 0.0
    %1217 = vmatmul.mubr.f32.gmra.mxu0 %v1147
    %v1218 = vpop.f32.mrf.mxu0
    %v1219 = vadd.f32 0.0, %v1218
    %v1220 = vpop.f32.mrf.mxu0
    %1221 = vmatprep.mubr.f32.mxu0 0.0
    %1222 = vmatmul.mubr.f32.gmra.mxu0 %v1150
    %v1223 = vpop.f32.mrf.mxu0
    %v1224 = vadd.f32 0.0, %v1223
    %v1225 = vpop.f32.mrf.mxu0
    %1226 = vdwg.mxu0
    %v1227 = vmax.f32 %v1219, 0.0
    %v1228 = vmax.f32 %v1224, 0.0
    %v1229 = vld [vmem:[%s10] sm:$0xff]
    %v1230 = vld [vmem:[%s10 + $0x8] sm:$0xff]
    %v1231 = vld [vmem:[%s10 + $0x10] sm:$0xff]
    %v1232 = vld [vmem:[%s10 + $0x18] sm:$0xff]
    %v1233 = vld [vmem:[%s10 + $0x20] sm:$0xff]
    %v1234 = vld [vmem:[%s10 + $0x28] sm:$0xff]
    %v1235 = vld [vmem:[%s10 + $0x30] sm:$0xff]
    %v1236 = vld [vmem:[%s10 + $0x38] sm:$0xff]
    %vm1237 = vcmask 523264
    %v1239 = vsel %vm1237, %v1227, 0
    %v1242 = vsel %vm1237, %v1228, 0
    %1244 = vmatprep.subr.mxu0 0.0
    %1245 = vmatpush1.msra.mxu0 0.0
    %1246 = vmatprep.subr.mxu0 0.0
    %1247 = vmatpush1.msra.mxu0 0.0
    %1248 = vmatprep.subr.mxu0 0.0
    %1249 = vmatpush1.msra.mxu0 0.0
    %1250 = vmatprep.subr.mxu0 0.0
    %1251 = vmatpush1.msra.mxu0 0.0
    %1252 = vmatprep.subr.mxu0 0.0
    %1253 = vmatpush1.msra.mxu0 0.0
    %1254 = vmatprep.subr.mxu0 0.0
    %1255 = vmatpush1.msra.mxu0 0.0
    %1256 = vmatprep.subr.mxu0 0.0
    %1257 = vmatpush1.msra.mxu0 0.0
    %1258 = vmatprep.subr.mxu0 0.0
    %1259 = vmatpush1.msra.mxu0 0.0
    %1260 = vmatprep.subr.mxu0 0.0
    %1261 = vmatpush1.msra.mxu0 %v1236
    %1262 = vmatprep.subr.mxu0 0.0
    %1263 = vmatpush1.msra.mxu0 %v1235
    %1264 = vmatprep.subr.mxu0 0.0
    %1265 = vmatpush1.msra.mxu0 %v1234
    %1266 = vmatprep.subr.mxu0 0.0
    %1267 = vmatpush1.msra.mxu0 %v1233
    %1268 = vmatprep.subr.mxu0 0.0
    %1269 = vmatpush1.msra.mxu0 %v1232
    %1270 = vmatprep.subr.mxu0 0.0
    %1271 = vmatpush1.msra.mxu0 %v1231
    %1272 = vmatprep.subr.mxu0 0.0
    %1273 = vmatpush1.msra.mxu0 %v1230
    %1274 = vmatprep.subr.mxu0 0.0
    %1275 = vmatpush1.msra.mxu0 %v1229
    %1276 = vmatprep.subr.mxu0 0.0
    %1277 = vmatpush2.msra.mxu0 0.0
    %1278 = vmatprep.subr.mxu0 0.0
    %1279 = vmatpush2.msra.mxu0 0.0
    %1280 = vmatprep.subr.mxu0 0.0
    %1281 = vmatpush2.msra.mxu0 0.0
    %1282 = vmatprep.subr.mxu0 0.0
    %1283 = vmatpush2.msra.mxu0 0.0
    %1284 = vmatprep.subr.mxu0 0.0
    %1285 = vmatpush2.msra.mxu0 0.0
    %1286 = vmatprep.subr.mxu0 0.0
    %1287 = vmatpush2.msra.mxu0 0.0
    %1288 = vmatprep.subr.mxu0 0.0
    %1289 = vmatpush2.msra.mxu0 0.0
    %1290 = vmatprep.subr.mxu0 0.0
    %1291 = vmatpush2.msra.mxu0 0.0
    %1292 = vmatprep.subr.mxu0 0.0
    %1293 = vmatpush2.msra.mxu0 0.0
    %1294 = vmatprep.subr.mxu0 0.0
    %1295 = vmatpush2.msra.mxu0 0.0
    %1296 = vmatprep.subr.mxu0 0.0
    %1297 = vmatpush2.msra.mxu0 0.0
    %1298 = vmatprep.subr.mxu0 0.0
    %1299 = vmatpush2.msra.mxu0 0.0
    %1300 = vmatprep.subr.mxu0 0.0
    %1301 = vmatpush2.msra.mxu0 0.0
    %1302 = vmatprep.subr.mxu0 0.0
    %1303 = vmatpush2.msra.mxu0 0.0
    %1304 = vmatprep.subr.mxu0 0.0
    %1305 = vmatpush2.msra.mxu0 0.0
    %1306 = vmatprep.subr.mxu0 0.0
    %1307 = vmatpush2.msra.mxu0 0.0
    %1308 = vmatprep.mubr.f32.mxu0 0.0
    %1309 = vmatmul.mubr.f32.gmra.mxu0 %v1239
    %v1310 = vpop.f32.mrf.mxu0
    %v1311 = vadd.f32 0.0, %v1310
    %v1312 = vpop.f32.mrf.mxu0
    %1313 = vmatprep.mubr.f32.mxu0 0.0
    %1314 = vmatmul.mubr.f32.gmra.mxu0 %v1242
    %v1315 = vpop.f32.mrf.mxu0
    %v1316 = vadd.f32 0.0, %v1315
    %v1317 = vpop.f32.mrf.mxu0
    %1318 = vdwg.mxu0
    %v1319 = vadd.f32 %v1096, %v1311
    %v1320 = vadd.f32 %v1097, %v1316
    %1321 = vst.msk [vmem:[#allocation8] sm:$0xff] %vm88, %v1319
    %1322 = vst.msk [vmem:[#allocation8 + $0x8] sm:$0xff] %vm88, %v1320
    // Predicated region
    $region58: #{tpu_custom_call.1} parent=1 // pred_check
      _
    $region59: #{tpu_custom_call.1} parent=1 // pred_check_branch
      %1324 = sbr.rel (0) target = $region61
    $region60: #{tpu_custom_call.1} parent=1 // pred_region
      %s1326 = ssub.s32 256, 256
      %1327 = vsyncadd [#allocation4], %s1326
      %s1328 = sshll.u32 [#allocation8], 4
      %s1329 = int_to_ptr.vmem [resolvable:$true] %s1328
      %1334 = dma.vmem_to_hbm [thread:$0]  %s1329, 256, %s11, [#allocation4], 128, 128, 8
    $region61: #{tpu_custom_call.1} parent=1 // pred_fallthru
      _
    // Predicated region
    $region62: #{tpu_custom_call.1} parent=1 // pred_check
      _
    $region63: #{tpu_custom_call.1} parent=1 // pred_check_branch
      %1336 = sbr.rel (0) target = $region65
    $region64: #{tpu_custom_call.1} parent=1 // pred_region
      %1337 = dma.done [#allocation4], 256
    $region65: #{tpu_custom_call.1} parent=1 // pred_fallthru
      _
    %1338 = vsyncpa [#allocation3], 1
    %1339 = vsyncpa [#allocation6], 1
    %1340 = vsyncpa [#allocation4], 1

</llo_original>
